<compile_context>
chip_gen: v7x
topology: tpu7x:2x2x1
jax: 0.10.0
libtpu: 0.0.40
codegen_flags: <defaults>
</compile_context>

<pallas_src>
import functools

import jax
import jax.numpy as jnp
from jax import lax
from jax.experimental import pallas as pl
from jax.experimental.pallas import tpu as pltpu

# MXU operand dtype.  bf16 is MXU-native on v5e / v6e / v7x; f32 operands are
# emulated with multiple MXU passes.  Accumulation is kept in f32 via
# preferred_element_type, and all elementwise math below stays f32 (that is
# the part v5e cannot do in bf16 — NOT the MXU operands).
MATMUL_DTYPE = jnp.bfloat16


def _sigmoid(x):
    # Single EUP tanh + VPU mul/add (co-issued in spare VALU slots), instead
    # of a potential exp + reciprocal double EUP round-trip per gate.
    return 0.5 * jnp.tanh(0.5 * x) + 0.5


def lstm_nn_kernel(x_ref, wih_ref, whh_ref, b_ref,
                   gamma_ref, beta_ref, wout_ref, bout_ref,
                   o_ref, xg_ref, *, t_steps, b_real):
    TB, _ = x_ref.shape
    Bp = TB // t_steps
    Hp = whh_ref.shape[0]

    whh = whh_ref[...].astype(MATMUL_DTYPE)          # [Hp, 4Hp]

    # ---- Hoisted input projection: ONE MXU call covers every timestep.  The
    # result is parked in VMEM scratch and sliced per step, so the whole
    # [T*Bp, 4Hp] tensor never stays live in vregs across the unrolled loop.
    xg_ref[...] = jnp.dot(x_ref[...].astype(MATMUL_DTYPE),
                          wih_ref[...].astype(MATMUL_DTYPE),
                          preferred_element_type=jnp.float32) + b_ref[...]

    h = jnp.zeros((Bp, Hp), jnp.float32)
    c = jnp.zeros((Bp, Hp), jnp.float32)

    # ---- Recurrence, fully unrolled (t_steps is static): only h @ w_hh stays
    # on the serial critical path; gate slices are 128-lane aligned (Hp=128).
    # TODO(synk): hold w_hh resident in the MXU weight staging across the time
    # loop via pltpu.matmul_push_rhs / matmul_acc_lhs / matmul_pop (2x256-wide
    # N-tiles on v6e/v7x, 4x128 tiles on v5e's 4 MXUs) to drop the per-step
    # systolic-array refill; kept on jnp.dot here for portability/correctness.
    for t in range(t_steps):
        gates = xg_ref[pl.ds(t * Bp, Bp), :] + jnp.dot(
            h.astype(MATMUL_DTYPE), whh, preferred_element_type=jnp.float32)
        i_g = _sigmoid(gates[:, 0 * Hp:1 * Hp])
        f_g = _sigmoid(gates[:, 1 * Hp:2 * Hp])
        g_g = jnp.tanh(gates[:, 2 * Hp:3 * Hp])
        o_g = _sigmoid(gates[:, 3 * Hp:4 * Hp])
        c = f_g * c + i_g * g_g
        h = o_g * jnp.tanh(c)

    # ---- BatchNorm1d (training mode): batch mean / biased variance computed
    # over the REAL batch rows only (padded rows are excluded from the stats).
    row = lax.broadcasted_iota(jnp.int32, (Bp, 1), 0)
    valid = row < b_real
    inv_n = 1.0 / b_real
    h_m = jnp.where(valid, h, 0.0)
    mu = jnp.sum(h_m, axis=0, keepdims=True) * inv_n
    d = jnp.where(valid, h - mu, 0.0)
    var = jnp.sum(d * d, axis=0, keepdims=True) * inv_n
    xn = (h - mu) * lax.rsqrt(var + 1e-5)
    xn = xn * gamma_ref[...] + beta_ref[...]

    # ---- ReLU + output Linear (output tile is [Bp, Cp] -> unmasked store).
    xr = jnp.maximum(xn, 0.0)
    out = jnp.dot(xr.astype(MATMUL_DTYPE), wout_ref[...].astype(MATMUL_DTYPE),
                  preferred_element_type=jnp.float32) + bout_ref[...]
    o_ref[...] = out


def _round_up(x, m):
    return ((x + m - 1) // m) * m


def _pad_axis(a, axis, new_size):
    pad = [(0, 0)] * a.ndim
    pad[axis] = (0, new_size - a.shape[axis])
    return jnp.pad(a, pad)


def _pad_gate_blocks(w, h, hp):
    """Pad each of the 4 concatenated gate blocks (last axis) from h to hp."""
    lead = w.shape[:-1]
    w4 = w.reshape(*lead, 4, h)
    w4 = _pad_axis(w4, w4.ndim - 1, hp)
    return w4.reshape(*lead, 4 * hp)


def prepare_params(w_ih, w_hh, bias, gamma, beta, w_out, b_out):
    """One-time weight padding (hoisted out of the per-call forward path)."""
    H = w_hh.shape[0]
    C = w_out.shape[1]
    Hp = _round_up(H, 128)            # 50 -> 128: lane-aligned gate slices
    Cp = _round_up(C, 128)            # 4 -> 128: unmasked output store
    padded = (
        _pad_gate_blocks(w_ih, H, Hp),                           # [E, 4Hp]
        _pad_axis(_pad_gate_blocks(w_hh, H, Hp), 0, Hp),         # [Hp, 4Hp]
        _pad_gate_blocks(bias, H, Hp),                           # [1, 4Hp]
        _pad_axis(gamma, 1, Hp),                                 # [1, Hp]
        _pad_axis(beta, 1, Hp),                                  # [1, Hp]
        _pad_axis(_pad_axis(w_out, 0, Hp), 1, Cp),               # [Hp, Cp]
        _pad_axis(b_out, 1, Cp),                                 # [1, Cp]
    )
    return jax.device_put(padded), C


@functools.partial(jax.jit, static_argnames=("num_classes",))
def lstm_nn_forward(x_bte, padded_params, *, num_classes):
    """x_bte: [B, T, E] (PyTorch batch_first layout). Returns [B, num_classes]."""
    w_ih_p, w_hh_p, bias_p, gamma_p, beta_p, w_out_p, b_out_p = padded_params
    B, T, E = x_bte.shape
    Hp = w_hh_p.shape[0]
    Cp = w_out_p.shape[1]
    Bp = _round_up(max(B, 8), 8)      # full sublanes

    # Per-call input prep only: pad batch, go time-major, and pre-flatten to
    # [T*Bp, E] so the kernel needs no in-kernel reshape (no VMEM relayout).
    x_p = jnp.transpose(_pad_axis(x_bte, 0, Bp), (1, 0, 2)).reshape(T * Bp, E)

    vmem = pl.BlockSpec(memory_space=pltpu.MemorySpace.VMEM)
    kernel = functools.partial(lstm_nn_kernel, t_steps=T, b_real=B)

    # TODO(synk): for larger real batches add grid=(Bp//TILE_B,) with
    # dimension_semantics=("parallel",) to reach the second v7x TensorCore;
    # BatchNorm batch stats then span tiles and need a two-phase / cross-core
    # (CMEM) reduction.  If a scaled-up fully-VMEM-resident variant is built,
    # size against v7x's 64 MiB physical / 32 MiB scoped VMEM (raise
    # vmem_limit_bytes); current footprint is well under 1 MiB.
    out_p = pl.pallas_call(
        kernel,
        out_shape=jax.ShapeDtypeStruct((Bp, Cp), jnp.float32),
        in_specs=[vmem] * 8,
        out_specs=vmem,
        scratch_shapes=[pltpu.VMEM((T * Bp, 4 * Hp), jnp.float32)],
    )(x_p, w_ih_p, w_hh_p, bias_p, gamma_p, beta_p, w_out_p, b_out_p)

    return out_p[:B, :num_classes]


def make_params(key, embedding_size, hidden_size, num_classes):
    """Deterministic synthetic parameters (shapes match nn.LSTM/BatchNorm1d/Linear)."""
    ks = jax.random.split(key, 6)
    scale = 1.0 / jnp.sqrt(hidden_size)
    # torch stores weight_ih as [4H, E]; we keep the transposed [E, 4H] form.
    w_ih = jax.random.uniform(ks[0], (embedding_size, 4 * hidden_size),
                              jnp.float32, -scale, scale)
    w_hh = jax.random.uniform(ks[1], (hidden_size, 4 * hidden_size),
                              jnp.float32, -scale, scale)
    b_ih = jax.random.uniform(ks[2], (4 * hidden_size,), jnp.float32, -scale, scale)
    b_hh = jax.random.uniform(ks[3], (4 * hidden_size,), jnp.float32, -scale, scale)
    bias = (b_ih + b_hh).reshape(1, 4 * hidden_size)
    gamma = jnp.ones((1, hidden_size), jnp.float32)    # BatchNorm1d weight
    beta = jnp.zeros((1, hidden_size), jnp.float32)    # BatchNorm1d bias
    w_out = jax.random.uniform(ks[4], (hidden_size, num_classes),
                               jnp.float32, -scale, scale)
    b_out = jax.random.uniform(ks[5], (1, num_classes),
                               jnp.float32, -scale, scale)
    return w_ih, w_hh, bias, gamma, beta, w_out, b_out


def reference_forward(x_bte, w_ih, w_hh, bias, gamma, beta, w_out, b_out,
                      matmul_dtype=jnp.float32):
    """Pure-JAX reference of the same forward pass (matmul operand dtype is
    configurable so the check against the bf16-operand kernel is apples-to-apples)."""
    B, T, _ = x_bte.shape
    H = w_hh.shape[0]

    def mm(a, b):
        return jnp.dot(a.astype(matmul_dtype), b.astype(matmul_dtype),
                       preferred_element_type=jnp.float32)

    h = jnp.zeros((B, H), jnp.float32)
    c = jnp.zeros((B, H), jnp.float32)
    for t in range(T):
        gates = mm(x_bte[:, t, :], w_ih) + mm(h, w_hh) + bias
        i = _sigmoid(gates[:, 0 * H:1 * H])
        f = _sigmoid(gates[:, 1 * H:2 * H])
        g = jnp.tanh(gates[:, 2 * H:3 * H])
        o = _sigmoid(gates[:, 3 * H:4 * H])
        c = f * c + i * g
        h = o * jnp.tanh(c)
    mu = jnp.mean(h, axis=0, keepdims=True)
    var = jnp.mean((h - mu) ** 2, axis=0, keepdims=True)
    xn = (h - mu) * lax.rsqrt(var + 1e-5) * gamma + beta
    xr = jnp.maximum(xn, 0.0)
    return mm(xr, w_out) + b_out


if __name__ == "__main__":
    # Shapes consistent with the module: batch=2, context_length(seq)=8,
    # embedding_size=16, hidden_size=50 (fixed in LstmNN.__init__), classes=4.
    B, T, E, H, C = 2, 8, 16, 50, 4

    key = jax.random.PRNGKey(0)
    kx, kp = jax.random.split(key)
    x = jax.random.normal(kx, (B, T, E), jnp.float32)
    params = make_params(kp, E, H, C)

    padded, num_classes = prepare_params(*params)
    out = jax.block_until_ready(lstm_nn_forward(x, padded, num_classes=num_classes))

    # Verify against a reference that applies the same bf16 MXU operand
    # rounding; tolerance is looser than a pure-f32 check because BatchNorm
    # over a batch of 2 can amplify tiny per-feature differences in h.
    ref = reference_forward(x, *params, matmul_dtype=MATMUL_DTYPE)

    assert out.shape == (B, C)
    assert jnp.allclose(out, ref, atol=1e-2, rtol=1e-2), "mismatch vs JAX reference"

    print("KERNEL_OK")
</pallas_src>

<mosaic_0001>
module attributes {stable_mosaic.version = 11 : i64} {
  func.func @lstm_nn_kernel(%arg0: memref<64x16xf32, #tpu.memory_space<vmem>>, %arg1: memref<16x512xf32, #tpu.memory_space<vmem>>, %arg2: memref<128x512xf32, #tpu.memory_space<vmem>>, %arg3: memref<1x512xf32, #tpu.memory_space<vmem>>, %arg4: memref<1x128xf32, #tpu.memory_space<vmem>>, %arg5: memref<1x128xf32, #tpu.memory_space<vmem>>, %arg6: memref<128x128xf32, #tpu.memory_space<vmem>>, %arg7: memref<1x128xf32, #tpu.memory_space<vmem>>, %arg8: memref<8x128xf32, #tpu.memory_space<vmem>>, %arg9: memref<64x512xf32, #tpu.memory_space<vmem>>) attributes {dimension_semantics = [], scalar_prefetch = 0 : i64, scratch_operands = 1 : i64, tpu.core_type = #tpu.core_type<tc>} {
    %c0 = arith.constant 0 : index
    %c0_0 = arith.constant 0 : index
    %0 = vector.load %arg2[%c0, %c0_0] : memref<128x512xf32, #tpu.memory_space<vmem>>, vector<128x512xf32>
    %1 = arith.truncf %0 : vector<128x512xf32> to vector<128x512xbf16>
    %c0_1 = arith.constant 0 : index
    %c0_2 = arith.constant 0 : index
    %2 = vector.load %arg0[%c0_1, %c0_2] : memref<64x16xf32, #tpu.memory_space<vmem>>, vector<64x16xf32>
    %3 = arith.truncf %2 : vector<64x16xf32> to vector<64x16xbf16>
    %c0_3 = arith.constant 0 : index
    %c0_4 = arith.constant 0 : index
    %4 = vector.load %arg1[%c0_3, %c0_4] : memref<16x512xf32, #tpu.memory_space<vmem>>, vector<16x512xf32>
    %5 = arith.truncf %4 : vector<16x512xf32> to vector<16x512xbf16>
    %cst = arith.constant dense<0.000000e+00> : vector<64x512xf32>
    %6 = tpu.matmul %3, %5, %cst {dimension_numbers = #tpu.dot_dimension_numbers<[1], [0], [0], [1], [0, 0, 1, 1], [], []>} : vector<64x16xbf16>, vector<16x512xbf16>, vector<64x512xf32> -> vector<64x512xf32>
    %c0_5 = arith.constant 0 : index
    %c0_6 = arith.constant 0 : index
    %7 = vector.load %arg3[%c0_5, %c0_6] : memref<1x512xf32, #tpu.memory_space<vmem>>, vector<1x512xf32>
    %8 = vector.broadcast %7 : vector<1x512xf32> to vector<64x512xf32>
    %9 = arith.addf %6, %8 : vector<64x512xf32>
    %c0_7 = arith.constant 0 : index
    %c0_8 = arith.constant 0 : index
    %10 = vector.load %arg9[%c0_7, %c0_8] : memref<64x512xf32, #tpu.memory_space<vmem>>, vector<64x512xf32>
    tpu.vector_store %arg9[%c0_7, %c0_8], %9 {strides = array<i32>} : memref<64x512xf32, #tpu.memory_space<vmem>>, vector<64x512xf32>,
    %cst_9 = arith.constant 0.000000e+00 : f32
    %11 = vector.broadcast %cst_9 : f32 to vector<8x128xf32>
    %cst_10 = arith.constant 0.000000e+00 : f32
    %12 = vector.broadcast %cst_10 : f32 to vector<8x128xf32>
    %c0_11 = arith.constant 0 : index
    %c0_12 = arith.constant 0 : index
    %13 = vector.load %arg9[%c0_11, %c0_12] : memref<64x512xf32, #tpu.memory_space<vmem>>, vector<8x512xf32>
    %14 = arith.truncf %11 : vector<8x128xf32> to vector<8x128xbf16>
    %cst_13 = arith.constant dense<0.000000e+00> : vector<8x512xf32>
    %15 = tpu.matmul %14, %1, %cst_13 {dimension_numbers = #tpu.dot_dimension_numbers<[1], [0], [0], [1], [0, 0, 1, 1], [], []>} : vector<8x128xbf16>, vector<128x512xbf16>, vector<8x512xf32> -> vector<8x512xf32>
    %16 = arith.addf %13, %15 : vector<8x512xf32>
    %17 = vector.extract_strided_slice %16 {offsets = [0, 0], sizes = [8, 128], strides = [1, 1]} : vector<8x512xf32> to vector<8x128xf32>
    %cst_14 = arith.constant 5.000000e-01 : f32
    %18 = vector.broadcast %cst_14 : f32 to vector<8x128xf32>
    %19 = arith.mulf %18, %17 : vector<8x128xf32>
    %20 = math.tanh %19 : vector<8x128xf32>
    %cst_15 = arith.constant 5.000000e-01 : f32
    %21 = vector.broadcast %cst_15 : f32 to vector<8x128xf32>
    %22 = arith.mulf %21, %20 : vector<8x128xf32>
    %cst_16 = arith.constant 5.000000e-01 : f32
    %23 = vector.broadcast %cst_16 : f32 to vector<8x128xf32>
    %24 = arith.addf %22, %23 : vector<8x128xf32>
    %25 = vector.extract_strided_slice %16 {offsets = [0, 128], sizes = [8, 128], strides = [1, 1]} : vector<8x512xf32> to vector<8x128xf32>
    %cst_17 = arith.constant 5.000000e-01 : f32
    %26 = vector.broadcast %cst_17 : f32 to vector<8x128xf32>
    %27 = arith.mulf %26, %25 : vector<8x128xf32>
    %28 = math.tanh %27 : vector<8x128xf32>
    %cst_18 = arith.constant 5.000000e-01 : f32
    %29 = vector.broadcast %cst_18 : f32 to vector<8x128xf32>
    %30 = arith.mulf %29, %28 : vector<8x128xf32>
    %cst_19 = arith.constant 5.000000e-01 : f32
    %31 = vector.broadcast %cst_19 : f32 to vector<8x128xf32>
    %32 = arith.addf %30, %31 : vector<8x128xf32>
    %33 = vector.extract_strided_slice %16 {offsets = [0, 256], sizes = [8, 128], strides = [1, 1]} : vector<8x512xf32> to vector<8x128xf32>
    %34 = math.tanh %33 : vector<8x128xf32>
    %35 = vector.extract_strided_slice %16 {offsets = [0, 384], sizes = [8, 128], strides = [1, 1]} : vector<8x512xf32> to vector<8x128xf32>
    %cst_20 = arith.constant 5.000000e-01 : f32
    %36 = vector.broadcast %cst_20 : f32 to vector<8x128xf32>
    %37 = arith.mulf %36, %35 : vector<8x128xf32>
    %38 = math.tanh %37 : vector<8x128xf32>
    %cst_21 = arith.constant 5.000000e-01 : f32
    %39 = vector.broadcast %cst_21 : f32 to vector<8x128xf32>
    %40 = arith.mulf %39, %38 : vector<8x128xf32>
    %cst_22 = arith.constant 5.000000e-01 : f32
    %41 = vector.broadcast %cst_22 : f32 to vector<8x128xf32>
    %42 = arith.addf %40, %41 : vector<8x128xf32>
    %43 = arith.mulf %32, %12 : vector<8x128xf32>
    %44 = arith.mulf %24, %34 : vector<8x128xf32>
    %45 = arith.addf %43, %44 : vector<8x128xf32>
    %46 = math.tanh %45 : vector<8x128xf32>
    %47 = arith.mulf %42, %46 : vector<8x128xf32>
    %c8 = arith.constant 8 : index
    %c0_23 = arith.constant 0 : index
    %48 = vector.load %arg9[%c8, %c0_23] : memref<64x512xf32, #tpu.memory_space<vmem>>, vector<8x512xf32>
    %49 = arith.truncf %47 : vector<8x128xf32> to vector<8x128xbf16>
    %cst_24 = arith.constant dense<0.000000e+00> : vector<8x512xf32>
    %50 = tpu.matmul %49, %1, %cst_24 {dimension_numbers = #tpu.dot_dimension_numbers<[1], [0], [0], [1], [0, 0, 1, 1], [], []>} : vector<8x128xbf16>, vector<128x512xbf16>, vector<8x512xf32> -> vector<8x512xf32>
    %51 = arith.addf %48, %50 : vector<8x512xf32>
    %52 = vector.extract_strided_slice %51 {offsets = [0, 0], sizes = [8, 128], strides = [1, 1]} : vector<8x512xf32> to vector<8x128xf32>
    %cst_25 = arith.constant 5.000000e-01 : f32
    %53 = vector.broadcast %cst_25 : f32 to vector<8x128xf32>
    %54 = arith.mulf %53, %52 : vector<8x128xf32>
    %55 = math.tanh %54 : vector<8x128xf32>
    %cst_26 = arith.constant 5.000000e-01 : f32
    %56 = vector.broadcast %cst_26 : f32 to vector<8x128xf32>
    %57 = arith.mulf %56, %55 : vector<8x128xf32>
    %cst_27 = arith.constant 5.000000e-01 : f32
    %58 = vector.broadcast %cst_27 : f32 to vector<8x128xf32>
    %59 = arith.addf %57, %58 : vector<8x128xf32>
    %60 = vector.extract_strided_slice %51 {offsets = [0, 128], sizes = [8, 128], strides = [1, 1]} : vector<8x512xf32> to vector<8x128xf32>
    %cst_28 = arith.constant 5.000000e-01 : f32
    %61 = vector.broadcast %cst_28 : f32 to vector<8x128xf32>
    %62 = arith.mulf %61, %60 : vector<8x128xf32>
    %63 = math.tanh %62 : vector<8x128xf32>
    %cst_29 = arith.constant 5.000000e-01 : f32
    %64 = vector.broadcast %cst_29 : f32 to vector<8x128xf32>
    %65 = arith.mulf %64, %63 : vector<8x128xf32>
    %cst_30 = arith.constant 5.000000e-01 : f32
    %66 = vector.broadcast %cst_30 : f32 to vector<8x128xf32>
    %67 = arith.addf %65, %66 : vector<8x128xf32>
    %68 = vector.extract_strided_slice %51 {offsets = [0, 256], sizes = [8, 128], strides = [1, 1]} : vector<8x512xf32> to vector<8x128xf32>
    %69 = math.tanh %68 : vector<8x128xf32>
    %70 = vector.extract_strided_slice %51 {offsets = [0, 384], sizes = [8, 128], strides = [1, 1]} : vector<8x512xf32> to vector<8x128xf32>
    %cst_31 = arith.constant 5.000000e-01 : f32
    %71 = vector.broadcast %cst_31 : f32 to vector<8x128xf32>
    %72 = arith.mulf %71, %70 : vector<8x128xf32>
    %73 = math.tanh %72 : vector<8x128xf32>
    %cst_32 = arith.constant 5.000000e-01 : f32
    %74 = vector.broadcast %cst_32 : f32 to vector<8x128xf32>
    %75 = arith.mulf %74, %73 : vector<8x128xf32>
    %cst_33 = arith.constant 5.000000e-01 : f32
    %76 = vector.broadcast %cst_33 : f32 to vector<8x128xf32>
    %77 = arith.addf %75, %76 : vector<8x128xf32>
    %78 = arith.mulf %67, %45 : vector<8x128xf32>
    %79 = arith.mulf %59, %69 : vector<8x128xf32>
    %80 = arith.addf %78, %79 : vector<8x128xf32>
    %81 = math.tanh %80 : vector<8x128xf32>
    %82 = arith.mulf %77, %81 : vector<8x128xf32>
    %c16 = arith.constant 16 : index
    %c0_34 = arith.constant 0 : index
    %83 = vector.load %arg9[%c16, %c0_34] : memref<64x512xf32, #tpu.memory_space<vmem>>, vector<8x512xf32>
    %84 = arith.truncf %82 : vector<8x128xf32> to vector<8x128xbf16>
    %cst_35 = arith.constant dense<0.000000e+00> : vector<8x512xf32>
    %85 = tpu.matmul %84, %1, %cst_35 {dimension_numbers = #tpu.dot_dimension_numbers<[1], [0], [0], [1], [0, 0, 1, 1], [], []>} : vector<8x128xbf16>, vector<128x512xbf16>, vector<8x512xf32> -> vector<8x512xf32>
    %86 = arith.addf %83, %85 : vector<8x512xf32>
    %87 = vector.extract_strided_slice %86 {offsets = [0, 0], sizes = [8, 128], strides = [1, 1]} : vector<8x512xf32> to vector<8x128xf32>
    %cst_36 = arith.constant 5.000000e-01 : f32
    %88 = vector.broadcast %cst_36 : f32 to vector<8x128xf32>
    %89 = arith.mulf %88, %87 : vector<8x128xf32>
    %90 = math.tanh %89 : vector<8x128xf32>
    %cst_37 = arith.constant 5.000000e-01 : f32
    %91 = vector.broadcast %cst_37 : f32 to vector<8x128xf32>
    %92 = arith.mulf %91, %90 : vector<8x128xf32>
    %cst_38 = arith.constant 5.000000e-01 : f32
    %93 = vector.broadcast %cst_38 : f32 to vector<8x128xf32>
    %94 = arith.addf %92, %93 : vector<8x128xf32>
    %95 = vector.extract_strided_slice %86 {offsets = [0, 128], sizes = [8, 128], strides = [1, 1]} : vector<8x512xf32> to vector<8x128xf32>
    %cst_39 = arith.constant 5.000000e-01 : f32
    %96 = vector.broadcast %cst_39 : f32 to vector<8x128xf32>
    %97 = arith.mulf %96, %95 : vector<8x128xf32>
    %98 = math.tanh %97 : vector<8x128xf32>
    %cst_40 = arith.constant 5.000000e-01 : f32
    %99 = vector.broadcast %cst_40 : f32 to vector<8x128xf32>
    %100 = arith.mulf %99, %98 : vector<8x128xf32>
    %cst_41 = arith.constant 5.000000e-01 : f32
    %101 = vector.broadcast %cst_41 : f32 to vector<8x128xf32>
    %102 = arith.addf %100, %101 : vector<8x128xf32>
    %103 = vector.extract_strided_slice %86 {offsets = [0, 256], sizes = [8, 128], strides = [1, 1]} : vector<8x512xf32> to vector<8x128xf32>
    %104 = math.tanh %103 : vector<8x128xf32>
    %105 = vector.extract_strided_slice %86 {offsets = [0, 384], sizes = [8, 128], strides = [1, 1]} : vector<8x512xf32> to vector<8x128xf32>
    %cst_42 = arith.constant 5.000000e-01 : f32
    %106 = vector.broadcast %cst_42 : f32 to vector<8x128xf32>
    %107 = arith.mulf %106, %105 : vector<8x128xf32>
    %108 = math.tanh %107 : vector<8x128xf32>
    %cst_43 = arith.constant 5.000000e-01 : f32
    %109 = vector.broadcast %cst_43 : f32 to vector<8x128xf32>
    %110 = arith.mulf %109, %108 : vector<8x128xf32>
    %cst_44 = arith.constant 5.000000e-01 : f32
    %111 = vector.broadcast %cst_44 : f32 to vector<8x128xf32>
    %112 = arith.addf %110, %111 : vector<8x128xf32>
    %113 = arith.mulf %102, %80 : vector<8x128xf32>
    %114 = arith.mulf %94, %104 : vector<8x128xf32>
    %115 = arith.addf %113, %114 : vector<8x128xf32>
    %116 = math.tanh %115 : vector<8x128xf32>
    %117 = arith.mulf %112, %116 : vector<8x128xf32>
    %c24 = arith.constant 24 : index
    %c0_45 = arith.constant 0 : index
    %118 = vector.load %arg9[%c24, %c0_45] : memref<64x512xf32, #tpu.memory_space<vmem>>, vector<8x512xf32>
    %119 = arith.truncf %117 : vector<8x128xf32> to vector<8x128xbf16>
    %cst_46 = arith.constant dense<0.000000e+00> : vector<8x512xf32>
    %120 = tpu.matmul %119, %1, %cst_46 {dimension_numbers = #tpu.dot_dimension_numbers<[1], [0], [0], [1], [0, 0, 1, 1], [], []>} : vector<8x128xbf16>, vector<128x512xbf16>, vector<8x512xf32> -> vector<8x512xf32>
    %121 = arith.addf %118, %120 : vector<8x512xf32>
    %122 = vector.extract_strided_slice %121 {offsets = [0, 0], sizes = [8, 128], strides = [1, 1]} : vector<8x512xf32> to vector<8x128xf32>
    %cst_47 = arith.constant 5.000000e-01 : f32
    %123 = vector.broadcast %cst_47 : f32 to vector<8x128xf32>
    %124 = arith.mulf %123, %122 : vector<8x128xf32>
    %125 = math.tanh %124 : vector<8x128xf32>
    %cst_48 = arith.constant 5.000000e-01 : f32
    %126 = vector.broadcast %cst_48 : f32 to vector<8x128xf32>
    %127 = arith.mulf %126, %125 : vector<8x128xf32>
    %cst_49 = arith.constant 5.000000e-01 : f32
    %128 = vector.broadcast %cst_49 : f32 to vector<8x128xf32>
    %129 = arith.addf %127, %128 : vector<8x128xf32>
    %130 = vector.extract_strided_slice %121 {offsets = [0, 128], sizes = [8, 128], strides = [1, 1]} : vector<8x512xf32> to vector<8x128xf32>
    %cst_50 = arith.constant 5.000000e-01 : f32
    %131 = vector.broadcast %cst_50 : f32 to vector<8x128xf32>
    %132 = arith.mulf %131, %130 : vector<8x128xf32>
    %133 = math.tanh %132 : vector<8x128xf32>
    %cst_51 = arith.constant 5.000000e-01 : f32
    %134 = vector.broadcast %cst_51 : f32 to vector<8x128xf32>
    %135 = arith.mulf %134, %133 : vector<8x128xf32>
    %cst_52 = arith.constant 5.000000e-01 : f32
    %136 = vector.broadcast %cst_52 : f32 to vector<8x128xf32>
    %137 = arith.addf %135, %136 : vector<8x128xf32>
    %138 = vector.extract_strided_slice %121 {offsets = [0, 256], sizes = [8, 128], strides = [1, 1]} : vector<8x512xf32> to vector<8x128xf32>
    %139 = math.tanh %138 : vector<8x128xf32>
    %140 = vector.extract_strided_slice %121 {offsets = [0, 384], sizes = [8, 128], strides = [1, 1]} : vector<8x512xf32> to vector<8x128xf32>
    %cst_53 = arith.constant 5.000000e-01 : f32
    %141 = vector.broadcast %cst_53 : f32 to vector<8x128xf32>
    %142 = arith.mulf %141, %140 : vector<8x128xf32>
    %143 = math.tanh %142 : vector<8x128xf32>
    %cst_54 = arith.constant 5.000000e-01 : f32
    %144 = vector.broadcast %cst_54 : f32 to vector<8x128xf32>
    %145 = arith.mulf %144, %143 : vector<8x128xf32>
    %cst_55 = arith.constant 5.000000e-01 : f32
    %146 = vector.broadcast %cst_55 : f32 to vector<8x128xf32>
    %147 = arith.addf %145, %146 : vector<8x128xf32>
    %148 = arith.mulf %137, %115 : vector<8x128xf32>
    %149 = arith.mulf %129, %139 : vector<8x128xf32>
    %150 = arith.addf %148, %149 : vector<8x128xf32>
    %151 = math.tanh %150 : vector<8x128xf32>
    %152 = arith.mulf %147, %151 : vector<8x128xf32>
    %c32 = arith.constant 32 : index
    %c0_56 = arith.constant 0 : index
    %153 = vector.load %arg9[%c32, %c0_56] : memref<64x512xf32, #tpu.memory_space<vmem>>, vector<8x512xf32>
    %154 = arith.truncf %152 : vector<8x128xf32> to vector<8x128xbf16>
    %cst_57 = arith.constant dense<0.000000e+00> : vector<8x512xf32>
    %155 = tpu.matmul %154, %1, %cst_57 {dimension_numbers = #tpu.dot_dimension_numbers<[1], [0], [0], [1], [0, 0, 1, 1], [], []>} : vector<8x128xbf16>, vector<128x512xbf16>, vector<8x512xf32> -> vector<8x512xf32>
    %156 = arith.addf %153, %155 : vector<8x512xf32>
    %157 = vector.extract_strided_slice %156 {offsets = [0, 0], sizes = [8, 128], strides = [1, 1]} : vector<8x512xf32> to vector<8x128xf32>
    %cst_58 = arith.constant 5.000000e-01 : f32
    %158 = vector.broadcast %cst_58 : f32 to vector<8x128xf32>
    %159 = arith.mulf %158, %157 : vector<8x128xf32>
    %160 = math.tanh %159 : vector<8x128xf32>
    %cst_59 = arith.constant 5.000000e-01 : f32
    %161 = vector.broadcast %cst_59 : f32 to vector<8x128xf32>
    %162 = arith.mulf %161, %160 : vector<8x128xf32>
    %cst_60 = arith.constant 5.000000e-01 : f32
    %163 = vector.broadcast %cst_60 : f32 to vector<8x128xf32>
    %164 = arith.addf %162, %163 : vector<8x128xf32>
    %165 = vector.extract_strided_slice %156 {offsets = [0, 128], sizes = [8, 128], strides = [1, 1]} : vector<8x512xf32> to vector<8x128xf32>
    %cst_61 = arith.constant 5.000000e-01 : f32
    %166 = vector.broadcast %cst_61 : f32 to vector<8x128xf32>
    %167 = arith.mulf %166, %165 : vector<8x128xf32>
    %168 = math.tanh %167 : vector<8x128xf32>
    %cst_62 = arith.constant 5.000000e-01 : f32
    %169 = vector.broadcast %cst_62 : f32 to vector<8x128xf32>
    %170 = arith.mulf %169, %168 : vector<8x128xf32>
    %cst_63 = arith.constant 5.000000e-01 : f32
    %171 = vector.broadcast %cst_63 : f32 to vector<8x128xf32>
    %172 = arith.addf %170, %171 : vector<8x128xf32>
    %173 = vector.extract_strided_slice %156 {offsets = [0, 256], sizes = [8, 128], strides = [1, 1]} : vector<8x512xf32> to vector<8x128xf32>
    %174 = math.tanh %173 : vector<8x128xf32>
    %175 = vector.extract_strided_slice %156 {offsets = [0, 384], sizes = [8, 128], strides = [1, 1]} : vector<8x512xf32> to vector<8x128xf32>
    %cst_64 = arith.constant 5.000000e-01 : f32
    %176 = vector.broadcast %cst_64 : f32 to vector<8x128xf32>
    %177 = arith.mulf %176, %175 : vector<8x128xf32>
    %178 = math.tanh %177 : vector<8x128xf32>
    %cst_65 = arith.constant 5.000000e-01 : f32
    %179 = vector.broadcast %cst_65 : f32 to vector<8x128xf32>
    %180 = arith.mulf %179, %178 : vector<8x128xf32>
    %cst_66 = arith.constant 5.000000e-01 : f32
    %181 = vector.broadcast %cst_66 : f32 to vector<8x128xf32>
    %182 = arith.addf %180, %181 : vector<8x128xf32>
    %183 = arith.mulf %172, %150 : vector<8x128xf32>
    %184 = arith.mulf %164, %174 : vector<8x128xf32>
    %185 = arith.addf %183, %184 : vector<8x128xf32>
    %186 = math.tanh %185 : vector<8x128xf32>
    %187 = arith.mulf %182, %186 : vector<8x128xf32>
    %c40 = arith.constant 40 : index
    %c0_67 = arith.constant 0 : index
    %188 = vector.load %arg9[%c40, %c0_67] : memref<64x512xf32, #tpu.memory_space<vmem>>, vector<8x512xf32>
    %189 = arith.truncf %187 : vector<8x128xf32> to vector<8x128xbf16>
    %cst_68 = arith.constant dense<0.000000e+00> : vector<8x512xf32>
    %190 = tpu.matmul %189, %1, %cst_68 {dimension_numbers = #tpu.dot_dimension_numbers<[1], [0], [0], [1], [0, 0, 1, 1], [], []>} : vector<8x128xbf16>, vector<128x512xbf16>, vector<8x512xf32> -> vector<8x512xf32>
    %191 = arith.addf %188, %190 : vector<8x512xf32>
    %192 = vector.extract_strided_slice %191 {offsets = [0, 0], sizes = [8, 128], strides = [1, 1]} : vector<8x512xf32> to vector<8x128xf32>
    %cst_69 = arith.constant 5.000000e-01 : f32
    %193 = vector.broadcast %cst_69 : f32 to vector<8x128xf32>
    %194 = arith.mulf %193, %192 : vector<8x128xf32>
    %195 = math.tanh %194 : vector<8x128xf32>
    %cst_70 = arith.constant 5.000000e-01 : f32
    %196 = vector.broadcast %cst_70 : f32 to vector<8x128xf32>
    %197 = arith.mulf %196, %195 : vector<8x128xf32>
    %cst_71 = arith.constant 5.000000e-01 : f32
    %198 = vector.broadcast %cst_71 : f32 to vector<8x128xf32>
    %199 = arith.addf %197, %198 : vector<8x128xf32>
    %200 = vector.extract_strided_slice %191 {offsets = [0, 128], sizes = [8, 128], strides = [1, 1]} : vector<8x512xf32> to vector<8x128xf32>
    %cst_72 = arith.constant 5.000000e-01 : f32
    %201 = vector.broadcast %cst_72 : f32 to vector<8x128xf32>
    %202 = arith.mulf %201, %200 : vector<8x128xf32>
    %203 = math.tanh %202 : vector<8x128xf32>
    %cst_73 = arith.constant 5.000000e-01 : f32
    %204 = vector.broadcast %cst_73 : f32 to vector<8x128xf32>
    %205 = arith.mulf %204, %203 : vector<8x128xf32>
    %cst_74 = arith.constant 5.000000e-01 : f32
    %206 = vector.broadcast %cst_74 : f32 to vector<8x128xf32>
    %207 = arith.addf %205, %206 : vector<8x128xf32>
    %208 = vector.extract_strided_slice %191 {offsets = [0, 256], sizes = [8, 128], strides = [1, 1]} : vector<8x512xf32> to vector<8x128xf32>
    %209 = math.tanh %208 : vector<8x128xf32>
    %210 = vector.extract_strided_slice %191 {offsets = [0, 384], sizes = [8, 128], strides = [1, 1]} : vector<8x512xf32> to vector<8x128xf32>
    %cst_75 = arith.constant 5.000000e-01 : f32
    %211 = vector.broadcast %cst_75 : f32 to vector<8x128xf32>
    %212 = arith.mulf %211, %210 : vector<8x128xf32>
    %213 = math.tanh %212 : vector<8x128xf32>
    %cst_76 = arith.constant 5.000000e-01 : f32
    %214 = vector.broadcast %cst_76 : f32 to vector<8x128xf32>
    %215 = arith.mulf %214, %213 : vector<8x128xf32>
    %cst_77 = arith.constant 5.000000e-01 : f32
    %216 = vector.broadcast %cst_77 : f32 to vector<8x128xf32>
    %217 = arith.addf %215, %216 : vector<8x128xf32>
    %218 = arith.mulf %207, %185 : vector<8x128xf32>
    %219 = arith.mulf %199, %209 : vector<8x128xf32>
    %220 = arith.addf %218, %219 : vector<8x128xf32>
    %221 = math.tanh %220 : vector<8x128xf32>
    %222 = arith.mulf %217, %221 : vector<8x128xf32>
    %c48 = arith.constant 48 : index
    %c0_78 = arith.constant 0 : index
    %223 = vector.load %arg9[%c48, %c0_78] : memref<64x512xf32, #tpu.memory_space<vmem>>, vector<8x512xf32>
    %224 = arith.truncf %222 : vector<8x128xf32> to vector<8x128xbf16>
    %cst_79 = arith.constant dense<0.000000e+00> : vector<8x512xf32>
    %225 = tpu.matmul %224, %1, %cst_79 {dimension_numbers = #tpu.dot_dimension_numbers<[1], [0], [0], [1], [0, 0, 1, 1], [], []>} : vector<8x128xbf16>, vector<128x512xbf16>, vector<8x512xf32> -> vector<8x512xf32>
    %226 = arith.addf %223, %225 : vector<8x512xf32>
    %227 = vector.extract_strided_slice %226 {offsets = [0, 0], sizes = [8, 128], strides = [1, 1]} : vector<8x512xf32> to vector<8x128xf32>
    %cst_80 = arith.constant 5.000000e-01 : f32
    %228 = vector.broadcast %cst_80 : f32 to vector<8x128xf32>
    %229 = arith.mulf %228, %227 : vector<8x128xf32>
    %230 = math.tanh %229 : vector<8x128xf32>
    %cst_81 = arith.constant 5.000000e-01 : f32
    %231 = vector.broadcast %cst_81 : f32 to vector<8x128xf32>
    %232 = arith.mulf %231, %230 : vector<8x128xf32>
    %cst_82 = arith.constant 5.000000e-01 : f32
    %233 = vector.broadcast %cst_82 : f32 to vector<8x128xf32>
    %234 = arith.addf %232, %233 : vector<8x128xf32>
    %235 = vector.extract_strided_slice %226 {offsets = [0, 128], sizes = [8, 128], strides = [1, 1]} : vector<8x512xf32> to vector<8x128xf32>
    %cst_83 = arith.constant 5.000000e-01 : f32
    %236 = vector.broadcast %cst_83 : f32 to vector<8x128xf32>
    %237 = arith.mulf %236, %235 : vector<8x128xf32>
    %238 = math.tanh %237 : vector<8x128xf32>
    %cst_84 = arith.constant 5.000000e-01 : f32
    %239 = vector.broadcast %cst_84 : f32 to vector<8x128xf32>
    %240 = arith.mulf %239, %238 : vector<8x128xf32>
    %cst_85 = arith.constant 5.000000e-01 : f32
    %241 = vector.broadcast %cst_85 : f32 to vector<8x128xf32>
    %242 = arith.addf %240, %241 : vector<8x128xf32>
    %243 = vector.extract_strided_slice %226 {offsets = [0, 256], sizes = [8, 128], strides = [1, 1]} : vector<8x512xf32> to vector<8x128xf32>
    %244 = math.tanh %243 : vector<8x128xf32>
    %245 = vector.extract_strided_slice %226 {offsets = [0, 384], sizes = [8, 128], strides = [1, 1]} : vector<8x512xf32> to vector<8x128xf32>
    %cst_86 = arith.constant 5.000000e-01 : f32
    %246 = vector.broadcast %cst_86 : f32 to vector<8x128xf32>
    %247 = arith.mulf %246, %245 : vector<8x128xf32>
    %248 = math.tanh %247 : vector<8x128xf32>
    %cst_87 = arith.constant 5.000000e-01 : f32
    %249 = vector.broadcast %cst_87 : f32 to vector<8x128xf32>
    %250 = arith.mulf %249, %248 : vector<8x128xf32>
    %cst_88 = arith.constant 5.000000e-01 : f32
    %251 = vector.broadcast %cst_88 : f32 to vector<8x128xf32>
    %252 = arith.addf %250, %251 : vector<8x128xf32>
    %253 = arith.mulf %242, %220 : vector<8x128xf32>
    %254 = arith.mulf %234, %244 : vector<8x128xf32>
    %255 = arith.addf %253, %254 : vector<8x128xf32>
    %256 = math.tanh %255 : vector<8x128xf32>
    %257 = arith.mulf %252, %256 : vector<8x128xf32>
    %c56 = arith.constant 56 : index
    %c0_89 = arith.constant 0 : index
    %258 = vector.load %arg9[%c56, %c0_89] : memref<64x512xf32, #tpu.memory_space<vmem>>, vector<8x512xf32>
    %259 = arith.truncf %257 : vector<8x128xf32> to vector<8x128xbf16>
    %cst_90 = arith.constant dense<0.000000e+00> : vector<8x512xf32>
    %260 = tpu.matmul %259, %1, %cst_90 {dimension_numbers = #tpu.dot_dimension_numbers<[1], [0], [0], [1], [0, 0, 1, 1], [], []>} : vector<8x128xbf16>, vector<128x512xbf16>, vector<8x512xf32> -> vector<8x512xf32>
    %261 = arith.addf %258, %260 : vector<8x512xf32>
    %262 = vector.extract_strided_slice %261 {offsets = [0, 0], sizes = [8, 128], strides = [1, 1]} : vector<8x512xf32> to vector<8x128xf32>
    %cst_91 = arith.constant 5.000000e-01 : f32
    %263 = vector.broadcast %cst_91 : f32 to vector<8x128xf32>
    %264 = arith.mulf %263, %262 : vector<8x128xf32>
    %265 = math.tanh %264 : vector<8x128xf32>
    %cst_92 = arith.constant 5.000000e-01 : f32
    %266 = vector.broadcast %cst_92 : f32 to vector<8x128xf32>
    %267 = arith.mulf %266, %265 : vector<8x128xf32>
    %cst_93 = arith.constant 5.000000e-01 : f32
    %268 = vector.broadcast %cst_93 : f32 to vector<8x128xf32>
    %269 = arith.addf %267, %268 : vector<8x128xf32>
    %270 = vector.extract_strided_slice %261 {offsets = [0, 128], sizes = [8, 128], strides = [1, 1]} : vector<8x512xf32> to vector<8x128xf32>
    %cst_94 = arith.constant 5.000000e-01 : f32
    %271 = vector.broadcast %cst_94 : f32 to vector<8x128xf32>
    %272 = arith.mulf %271, %270 : vector<8x128xf32>
    %273 = math.tanh %272 : vector<8x128xf32>
    %cst_95 = arith.constant 5.000000e-01 : f32
    %274 = vector.broadcast %cst_95 : f32 to vector<8x128xf32>
    %275 = arith.mulf %274, %273 : vector<8x128xf32>
    %cst_96 = arith.constant 5.000000e-01 : f32
    %276 = vector.broadcast %cst_96 : f32 to vector<8x128xf32>
    %277 = arith.addf %275, %276 : vector<8x128xf32>
    %278 = vector.extract_strided_slice %261 {offsets = [0, 256], sizes = [8, 128], strides = [1, 1]} : vector<8x512xf32> to vector<8x128xf32>
    %279 = math.tanh %278 : vector<8x128xf32>
    %280 = vector.extract_strided_slice %261 {offsets = [0, 384], sizes = [8, 128], strides = [1, 1]} : vector<8x512xf32> to vector<8x128xf32>
    %cst_97 = arith.constant 5.000000e-01 : f32
    %281 = vector.broadcast %cst_97 : f32 to vector<8x128xf32>
    %282 = arith.mulf %281, %280 : vector<8x128xf32>
    %283 = math.tanh %282 : vector<8x128xf32>
    %cst_98 = arith.constant 5.000000e-01 : f32
    %284 = vector.broadcast %cst_98 : f32 to vector<8x128xf32>
    %285 = arith.mulf %284, %283 : vector<8x128xf32>
    %cst_99 = arith.constant 5.000000e-01 : f32
    %286 = vector.broadcast %cst_99 : f32 to vector<8x128xf32>
    %287 = arith.addf %285, %286 : vector<8x128xf32>
    %288 = arith.mulf %277, %255 : vector<8x128xf32>
    %289 = arith.mulf %269, %279 : vector<8x128xf32>
    %290 = arith.addf %288, %289 : vector<8x128xf32>
    %291 = math.tanh %290 : vector<8x128xf32>
    %292 = arith.mulf %287, %291 : vector<8x128xf32>
    %293 = tpu.iota {dimensions = array<i32: 0>} : vector<8x1xi32>
    %c2_i32 = arith.constant 2 : i32
    %294 = vector.broadcast %c2_i32 : i32 to vector<8x1xi32>
    %295 = arith.cmpi slt, %293, %294 : vector<8x1xi32>
    %cst_100 = arith.constant 0.000000e+00 : f32
    %296 = vector.shape_cast %295 : vector<8x1xi1> to vector<8x1xi1>
    %297 = vector.broadcast %296 : vector<8x1xi1> to vector<8x128xi1>
    %298 = vector.broadcast %cst_100 : f32 to vector<8x128xf32>
    %299 = arith.select %297, %292, %298 : vector<8x128xi1>, vector<8x128xf32>
    %cst_101 = arith.constant dense<0.000000e+00> : vector<128xf32>
    %300 = vector.multi_reduction <add>, %299, %cst_101 [0] : vector<8x128xf32> to vector<128xf32>
    %301 = vector.shape_cast %300 : vector<128xf32> to vector<1x128xf32>
    %cst_102 = arith.constant 5.000000e-01 : f32
    %302 = vector.broadcast %cst_102 : f32 to vector<1x128xf32>
    %303 = arith.mulf %301, %302 : vector<1x128xf32>
    %304 = vector.broadcast %303 : vector<1x128xf32> to vector<8x128xf32>
    %305 = arith.subf %292, %304 : vector<8x128xf32>
    %cst_103 = arith.constant 0.000000e+00 : f32
    %306 = vector.shape_cast %295 : vector<8x1xi1> to vector<8x1xi1>
    %307 = vector.broadcast %306 : vector<8x1xi1> to vector<8x128xi1>
    %308 = vector.broadcast %cst_103 : f32 to vector<8x128xf32>
    %309 = arith.select %307, %305, %308 : vector<8x128xi1>, vector<8x128xf32>
    %310 = arith.mulf %309, %309 : vector<8x128xf32>
    %cst_104 = arith.constant dense<0.000000e+00> : vector<128xf32>
    %311 = vector.multi_reduction <add>, %310, %cst_104 [0] : vector<8x128xf32> to vector<128xf32>
    %312 = vector.shape_cast %311 : vector<128xf32> to vector<1x128xf32>
    %cst_105 = arith.constant 5.000000e-01 : f32
    %313 = vector.broadcast %cst_105 : f32 to vector<1x128xf32>
    %314 = arith.mulf %312, %313 : vector<1x128xf32>
    %315 = vector.broadcast %303 : vector<1x128xf32> to vector<8x128xf32>
    %316 = arith.subf %292, %315 : vector<8x128xf32>
    %cst_106 = arith.constant 9.99999974E-6 : f32
    %317 = vector.broadcast %cst_106 : f32 to vector<1x128xf32>
    %318 = arith.addf %314, %317 : vector<1x128xf32>
    %319 = math.rsqrt %318 : vector<1x128xf32>
    %320 = vector.broadcast %319 : vector<1x128xf32> to vector<8x128xf32>
    %321 = arith.mulf %316, %320 : vector<8x128xf32>
    %c0_107 = arith.constant 0 : index
    %c0_108 = arith.constant 0 : index
    %322 = vector.load %arg4[%c0_107, %c0_108] : memref<1x128xf32, #tpu.memory_space<vmem>>, vector<1x128xf32>
    %323 = vector.broadcast %322 : vector<1x128xf32> to vector<8x128xf32>
    %324 = arith.mulf %321, %323 : vector<8x128xf32>
    %c0_109 = arith.constant 0 : index
    %c0_110 = arith.constant 0 : index
    %325 = vector.load %arg5[%c0_109, %c0_110] : memref<1x128xf32, #tpu.memory_space<vmem>>, vector<1x128xf32>
    %326 = vector.broadcast %325 : vector<1x128xf32> to vector<8x128xf32>
    %327 = arith.addf %324, %326 : vector<8x128xf32>
    %cst_111 = arith.constant 0.000000e+00 : f32
    %328 = vector.broadcast %cst_111 : f32 to vector<8x128xf32>
    %329 = arith.maximumf %327, %328 : vector<8x128xf32>
    %330 = arith.truncf %329 : vector<8x128xf32> to vector<8x128xbf16>
    %c0_112 = arith.constant 0 : index
    %c0_113 = arith.constant 0 : index
    %331 = vector.load %arg6[%c0_112, %c0_113] : memref<128x128xf32, #tpu.memory_space<vmem>>, vector<128x128xf32>
    %332 = arith.truncf %331 : vector<128x128xf32> to vector<128x128xbf16>
    %cst_114 = arith.constant dense<0.000000e+00> : vector<8x128xf32>
    %333 = tpu.matmul %330, %332, %cst_114 {dimension_numbers = #tpu.dot_dimension_numbers<[1], [0], [0], [1], [0, 0, 1, 1], [], []>} : vector<8x128xbf16>, vector<128x128xbf16>, vector<8x128xf32> -> vector<8x128xf32>
    %c0_115 = arith.constant 0 : index
    %c0_116 = arith.constant 0 : index
    %334 = vector.load %arg7[%c0_115, %c0_116] : memref<1x128xf32, #tpu.memory_space<vmem>>, vector<1x128xf32>
    %335 = vector.broadcast %334 : vector<1x128xf32> to vector<8x128xf32>
    %336 = arith.addf %333, %335 : vector<8x128xf32>
    %c0_117 = arith.constant 0 : index
    %c0_118 = arith.constant 0 : index
    %337 = vector.load %arg8[%c0_117, %c0_118] : memref<8x128xf32, #tpu.memory_space<vmem>>, vector<8x128xf32>
    tpu.vector_store %arg8[%c0_117, %c0_118], %336 {strides = array<i32>} : memref<8x128xf32, #tpu.memory_space<vmem>>, vector<8x128xf32>,
    return
  }
}

</mosaic_0001>

<llo_original>
// kernel: lstm_nn_forward.1
$region0: #{lstm_nn_forward.1}
  #allocation0 [shape = 'u32[]', space=smem, size = 0x4, offset = 0x4, fixed_abs, tag = 'smem constant byte address 0x4 - core index']
  #allocation1 [shape = 'u32[144,128]{1,0:T(1,128)}', space=vmem, size = 0x12000, scoped, tag = 'internal scratch']
  #allocation2 [shape = 'f32[64,512]{1,0:T(8,128)}', space=vmem, size = 0x20000, scoped, tag = 'scratch operand']
  %s0 = inlined_call_operand.vmem [shape: f32[64,16], index: 0, kind: input, shape index: {}]
  %s1 = inlined_call_operand.vmem [shape: f32[16,512], index: 1, kind: input, shape index: {}]
  %s2 = inlined_call_operand.hbm [shape: f32[128,512], index: 2, kind: input, shape index: {}]
  %s3 = inlined_call_operand.vmem [shape: f32[1,512], index: 3, kind: input, shape index: {}]
  %s4 = inlined_call_operand.vmem [shape: f32[1,128], index: 4, kind: input, shape index: {}]
  %s5 = inlined_call_operand.vmem [shape: f32[1,128], index: 5, kind: input, shape index: {}]
  %s6 = inlined_call_operand.vmem [shape: f32[128,128], index: 6, kind: input, shape index: {}]
  %s7 = inlined_call_operand.vmem [shape: f32[1,128], index: 7, kind: input, shape index: {}]
  %s8 = inlined_call_operand.vmem [shape: f32[8,128], index: 8, kind: output, shape index: {}]
  %s9 = sld [smem:[#allocation0]]
  $region46: #{lstm_nn_forward.1} parent=0
    _
  %s11 = ssub.s32 1, %s9
  %s12 = scalar_select 0, %s11, %s9
  $region1: #{lstm_nn_forward.1} parent=0
    #allocation3 [shape = 'u8[262144]{0}', space=vmem, size = 0x40000, scoped, tag = 'input window, operand 2, single buffered']
    #allocation4 [shape = 's32[1]{0}', space=sflag, size = 0x4, scoped, tag = 'scoped memory for lstm_nn_forward.1']
    %13 = vsyncpa [#allocation4], 0
    // Predicated region
    $region2: #{lstm_nn_forward.1} parent=1 // pred_check
      _
    $region3: #{lstm_nn_forward.1} parent=1 // pred_check_branch
      %15 = sbr.rel (0) target = $region5
    $region4: #{lstm_nn_forward.1} parent=1 // pred_region
      _
    $region5: #{lstm_nn_forward.1} parent=1 // pred_fallthru
      _
    // Predicated region
    $region6: #{lstm_nn_forward.1} parent=1 // pred_check
      _
    $region7: #{lstm_nn_forward.1} parent=1 // pred_check_branch
      %17 = sbr.rel (0) target = $region9
    $region8: #{lstm_nn_forward.1} parent=1 // pred_region
      _
    $region9: #{lstm_nn_forward.1} parent=1 // pred_fallthru
      _
    // Predicated region
    $region10: #{lstm_nn_forward.1} parent=1 // pred_check
      _
    $region11: #{lstm_nn_forward.1} parent=1 // pred_check_branch
      %19 = sbr.rel (0) target = $region13
    $region12: #{lstm_nn_forward.1} parent=1 // pred_region
      %s21 = ssub.s32 8192, 8192
      %22 = vsyncadd [#allocation4], %s21
      %s23 = sshll.u32 [#allocation3], 4
      %s24 = int_to_ptr.vmem [resolvable:$true] %s23
      %29 = dma.hbm_to_vmem [thread:$0]  %s2, 8192, %s24, [#allocation4], 512, 512, 32
    $region13: #{lstm_nn_forward.1} parent=1 // pred_fallthru
      _
    // Predicated region
    $region14: #{lstm_nn_forward.1} parent=1 // pred_check
      _
    $region15: #{lstm_nn_forward.1} parent=1 // pred_check_branch
      %31 = sbr.rel (0) target = $region17
    $region16: #{lstm_nn_forward.1} parent=1 // pred_region
      _
    $region17: #{lstm_nn_forward.1} parent=1 // pred_fallthru
      _
    // Predicated region
    $region18: #{lstm_nn_forward.1} parent=1 // pred_check
      _
    $region19: #{lstm_nn_forward.1} parent=1 // pred_check_branch
      %33 = sbr.rel (0) target = $region21
    $region20: #{lstm_nn_forward.1} parent=1 // pred_region
      _
    $region21: #{lstm_nn_forward.1} parent=1 // pred_fallthru
      _
    // Predicated region
    $region22: #{lstm_nn_forward.1} parent=1 // pred_check
      _
    $region23: #{lstm_nn_forward.1} parent=1 // pred_check_branch
      %35 = sbr.rel (0) target = $region25
    $region24: #{lstm_nn_forward.1} parent=1 // pred_region
      _
    $region25: #{lstm_nn_forward.1} parent=1 // pred_fallthru
      _
    // Predicated region
    $region26: #{lstm_nn_forward.1} parent=1 // pred_check
      _
    $region27: #{lstm_nn_forward.1} parent=1 // pred_check_branch
      %37 = sbr.rel (0) target = $region29
    $region28: #{lstm_nn_forward.1} parent=1 // pred_region
      _
    $region29: #{lstm_nn_forward.1} parent=1 // pred_fallthru
      _
    // Predicated region
    $region30: #{lstm_nn_forward.1} parent=1 // pred_check
      _
    $region31: #{lstm_nn_forward.1} parent=1 // pred_check_branch
      %39 = sbr.rel (0) target = $region33
    $region32: #{lstm_nn_forward.1} parent=1 // pred_region
      _
    $region33: #{lstm_nn_forward.1} parent=1 // pred_fallthru
      _
    // Predicated region
    $region34: #{lstm_nn_forward.1} parent=1 // pred_check
      _
    $region35: #{lstm_nn_forward.1} parent=1 // pred_check_branch
      %41 = sbr.rel (0) target = $region37
    $region36: #{lstm_nn_forward.1} parent=1 // pred_region
      %42 = dma.done [#allocation4], 8192
    $region37: #{lstm_nn_forward.1} parent=1 // pred_fallthru
      _
    %v44 = vld [vmem:[#allocation3] sm:$0xff]
    %v45 = vld [vmem:[#allocation3 + $0x8] sm:$0xff]
    %v46 = vld [vmem:[#allocation3 + $0x10] sm:$0xff]
    %v47 = vld [vmem:[#allocation3 + $0x18] sm:$0xff]
    %v48 = vld [vmem:[#allocation3 + $0x20] sm:$0xff]
    %v49 = vld [vmem:[#allocation3 + $0x28] sm:$0xff]
    %v50 = vld [vmem:[#allocation3 + $0x30] sm:$0xff]
    %v51 = vld [vmem:[#allocation3 + $0x38] sm:$0xff]
    %v52 = vld [vmem:[#allocation3 + $0x40] sm:$0xff]
    %v53 = vld [vmem:[#allocation3 + $0x48] sm:$0xff]
    %v54 = vld [vmem:[#allocation3 + $0x50] sm:$0xff]
    %v55 = vld [vmem:[#allocation3 + $0x58] sm:$0xff]
    %v56 = vld [vmem:[#allocation3 + $0x60] sm:$0xff]
    %v57 = vld [vmem:[#allocation3 + $0x68] sm:$0xff]
    %v58 = vld [vmem:[#allocation3 + $0x70] sm:$0xff]
    %v59 = vld [vmem:[#allocation3 + $0x78] sm:$0xff]
    %v60 = vld [vmem:[#allocation3 + $0x80] sm:$0xff]
    %v61 = vld [vmem:[#allocation3 + $0x88] sm:$0xff]
    %v62 = vld [vmem:[#allocation3 + $0x90] sm:$0xff]
    %v63 = vld [vmem:[#allocation3 + $0x98] sm:$0xff]
    %v64 = vld [vmem:[#allocation3 + $0xa0] sm:$0xff]
    %v65 = vld [vmem:[#allocation3 + $0xa8] sm:$0xff]
    %v66 = vld [vmem:[#allocation3 + $0xb0] sm:$0xff]
    %v67 = vld [vmem:[#allocation3 + $0xb8] sm:$0xff]
    %v68 = vld [vmem:[#allocation3 + $0xc0] sm:$0xff]
    %v69 = vld [vmem:[#allocation3 + $0xc8] sm:$0xff]
    %v70 = vld [vmem:[#allocation3 + $0xd0] sm:$0xff]
    %v71 = vld [vmem:[#allocation3 + $0xd8] sm:$0xff]
    %v72 = vld [vmem:[#allocation3 + $0xe0] sm:$0xff]
    %v73 = vld [vmem:[#allocation3 + $0xe8] sm:$0xff]
    %v74 = vld [vmem:[#allocation3 + $0xf0] sm:$0xff]
    %v75 = vld [vmem:[#allocation3 + $0xf8] sm:$0xff]
    %v76 = vld [vmem:[#allocation3 + $0x100] sm:$0xff]
    %v77 = vld [vmem:[#allocation3 + $0x108] sm:$0xff]
    %v78 = vld [vmem:[#allocation3 + $0x110] sm:$0xff]
    %v79 = vld [vmem:[#allocation3 + $0x118] sm:$0xff]
    %v80 = vld [vmem:[#allocation3 + $0x120] sm:$0xff]
    %v81 = vld [vmem:[#allocation3 + $0x128] sm:$0xff]
    %v82 = vld [vmem:[#allocation3 + $0x130] sm:$0xff]
    %v83 = vld [vmem:[#allocation3 + $0x138] sm:$0xff]
    %v84 = vld [vmem:[#allocation3 + $0x140] sm:$0xff]
    %v85 = vld [vmem:[#allocation3 + $0x148] sm:$0xff]
    %v86 = vld [vmem:[#allocation3 + $0x150] sm:$0xff]
    %v87 = vld [vmem:[#allocation3 + $0x158] sm:$0xff]
    %v88 = vld [vmem:[#allocation3 + $0x160] sm:$0xff]
    %v89 = vld [vmem:[#allocation3 + $0x168] sm:$0xff]
    %v90 = vld [vmem:[#allocation3 + $0x170] sm:$0xff]
    %v91 = vld [vmem:[#allocation3 + $0x178] sm:$0xff]
    %v92 = vld [vmem:[#allocation3 + $0x180] sm:$0xff]
    %v93 = vld [vmem:[#allocation3 + $0x188] sm:$0xff]
    %v94 = vld [vmem:[#allocation3 + $0x190] sm:$0xff]
    %v95 = vld [vmem:[#allocation3 + $0x198] sm:$0xff]
    %v96 = vld [vmem:[#allocation3 + $0x1a0] sm:$0xff]
    %v97 = vld [vmem:[#allocation3 + $0x1a8] sm:$0xff]
    %v98 = vld [vmem:[#allocation3 + $0x1b0] sm:$0xff]
    %v99 = vld [vmem:[#allocation3 + $0x1b8] sm:$0xff]
    %v100 = vld [vmem:[#allocation3 + $0x1c0] sm:$0xff]
    %v101 = vld [vmem:[#allocation3 + $0x1c8] sm:$0xff]
    %v102 = vld [vmem:[#allocation3 + $0x1d0] sm:$0xff]
    %v103 = vld [vmem:[#allocation3 + $0x1d8] sm:$0xff]
    %v104 = vld [vmem:[#allocation3 + $0x1e0] sm:$0xff]
    %v105 = vld [vmem:[#allocation3 + $0x1e8] sm:$0xff]
    %v106 = vld [vmem:[#allocation3 + $0x1f0] sm:$0xff]
    %v107 = vld [vmem:[#allocation3 + $0x1f8] sm:$0xff]
    %v108 = vpack.c.bf16 %v48, %v44
    %v109 = vpack.c.bf16 %v49, %v45
    %v110 = vpack.c.bf16 %v50, %v46
    %v111 = vpack.c.bf16 %v51, %v47
    %v112 = vpack.c.bf16 %v56, %v52
    %v113 = vpack.c.bf16 %v57, %v53
    %v114 = vpack.c.bf16 %v58, %v54
    %v115 = vpack.c.bf16 %v59, %v55
    %v116 = vpack.c.bf16 %v64, %v60
    %v117 = vpack.c.bf16 %v65, %v61
    %v118 = vpack.c.bf16 %v66, %v62
    %v119 = vpack.c.bf16 %v67, %v63
    %v120 = vpack.c.bf16 %v72, %v68
    %v121 = vpack.c.bf16 %v73, %v69
    %v122 = vpack.c.bf16 %v74, %v70
    %v123 = vpack.c.bf16 %v75, %v71
    %v124 = vpack.c.bf16 %v80, %v76
    %v125 = vpack.c.bf16 %v81, %v77
    %v126 = vpack.c.bf16 %v82, %v78
    %v127 = vpack.c.bf16 %v83, %v79
    %v128 = vpack.c.bf16 %v88, %v84
    %v129 = vpack.c.bf16 %v89, %v85
    %v130 = vpack.c.bf16 %v90, %v86
    %v131 = vpack.c.bf16 %v91, %v87
    %v132 = vpack.c.bf16 %v96, %v92
    %v133 = vpack.c.bf16 %v97, %v93
    %v134 = vpack.c.bf16 %v98, %v94
    %v135 = vpack.c.bf16 %v99, %v95
    %v136 = vpack.c.bf16 %v104, %v100
    %v137 = vpack.c.bf16 %v105, %v101
    %v138 = vpack.c.bf16 %v106, %v102
    %v139 = vpack.c.bf16 %v107, %v103
    %v140 = vld [vmem:[%s0] sm:$0xff]
    %v141 = vld [vmem:[%s0 + $0x8] sm:$0xff]
    %v142 = vld [vmem:[%s0 + $0x10] sm:$0xff]
    %v143 = vld [vmem:[%s0 + $0x18] sm:$0xff]
    %v144 = vld [vmem:[%s0 + $0x20] sm:$0xff]
    %v145 = vld [vmem:[%s0 + $0x28] sm:$0xff]
    %v146 = vld [vmem:[%s0 + $0x30] sm:$0xff]
    %v147 = vld [vmem:[%s0 + $0x38] sm:$0xff]
    %v148 = vpack.c.bf16 %v141, %v140
    %v149 = vpack.c.bf16 %v143, %v142
    %v150 = vpack.c.bf16 %v145, %v144
    %v151 = vpack.c.bf16 %v147, %v146
    %v152 = vld [vmem:[%s1] sm:$0xff]
    %v153 = vld [vmem:[%s1 + $0x8] sm:$0xff]
    %v154 = vld [vmem:[%s1 + $0x10] sm:$0xff]
    %v155 = vld [vmem:[%s1 + $0x18] sm:$0xff]
    %v156 = vld [vmem:[%s1 + $0x20] sm:$0xff]
    %v157 = vld [vmem:[%s1 + $0x28] sm:$0xff]
    %v158 = vld [vmem:[%s1 + $0x30] sm:$0xff]
    %v159 = vld [vmem:[%s1 + $0x38] sm:$0xff]
    %v160 = vpack.c.bf16 %v156, %v152
    %v161 = vpack.c.bf16 %v157, %v153
    %v162 = vpack.c.bf16 %v158, %v154
    %v163 = vpack.c.bf16 %v159, %v155
    %v164 = vld [vmem:[%s3] sm:$0xf]
    %v166 = vlaneseq
    %v167 = vshrl.u32 %v166, 7
    %v168 = vsub.s32 0, %v167
    %v169 = vrot.slane %v164, %v168
    %v170 = vlaneseq
    %v171 = vshrl.u32 %v170, 7
    %v172 = vsub.s32 1, %v171
    %v173 = vrot.slane %v164, %v172
    %v174 = vlaneseq
    %v175 = vshrl.u32 %v174, 7
    %v176 = vsub.s32 2, %v175
    %v177 = vrot.slane %v164, %v176
    %v178 = vlaneseq
    %v179 = vshrl.u32 %v178, 7
    %v180 = vsub.s32 3, %v179
    %v181 = vrot.slane %v164, %v180
    %vm186 = vcmask 130048
    %v188 = vsel %vm186, %v148, 0
    %v191 = vsel %vm186, %v149, 0
    %v194 = vsel %vm186, %v150, 0
    %v197 = vsel %vm186, %v151, 0
    %199 = vmatprep.subr.bf16.mxu0 %v161
    %200 = vmatpush1.bf16.msra.mxu0 %v160
    %201 = vmatprep.subr.bf16.mxu0 0
    %202 = vmatpush1.bf16.msra.mxu0 0
    %203 = vmatprep.subr.bf16.mxu0 0
    %204 = vmatpush1.bf16.msra.mxu0 0
    %205 = vmatprep.subr.bf16.mxu0 0
    %206 = vmatpush1.bf16.msra.mxu0 0
    %207 = vmatprep.subr.bf16.mxu0 0
    %208 = vmatpush1.bf16.msra.mxu0 0
    %209 = vmatprep.subr.bf16.mxu0 0
    %210 = vmatpush1.bf16.msra.mxu0 0
    %211 = vmatprep.subr.bf16.mxu0 0
    %212 = vmatpush1.bf16.msra.mxu0 0
    %213 = vmatprep.subr.bf16.mxu0 0
    %214 = vmatpush1.bf16.msra.mxu0 0
    %215 = vmatprep.subr.bf16.mxu0 0
    %216 = vmatpush1.bf16.msra.mxu0 0
    %217 = vmatprep.subr.bf16.mxu0 0
    %218 = vmatpush1.bf16.msra.mxu0 0
    %219 = vmatprep.subr.bf16.mxu0 0
    %220 = vmatpush1.bf16.msra.mxu0 0
    %221 = vmatprep.subr.bf16.mxu0 0
    %222 = vmatpush1.bf16.msra.mxu0 0
    %223 = vmatprep.subr.bf16.mxu0 0
    %224 = vmatpush1.bf16.msra.mxu0 0
    %225 = vmatprep.subr.bf16.mxu0 0
    %226 = vmatpush1.bf16.msra.mxu0 0
    %227 = vmatprep.subr.bf16.mxu0 0
    %228 = vmatpush1.bf16.msra.mxu0 0
    %229 = vmatprep.subr.bf16.mxu0 0
    %230 = vmatpush1.bf16.msra.mxu0 0
    %231 = vmatprep.mubr.bf16.mxu0 0
    %232 = vmatmul.mubr.bf16.gmra.mrb[0].mxu0 %v188
    %v233 = vpop.f32.mrb[0].mxu0
    %v234 = vadd.f32 %v169, %v233
    %v235 = vpop.f32.mrb[0].mxu0
    %v236 = vadd.f32 %v173, %v235
    %v237 = vpop.f32.mrb[0].mxu0
    %v238 = vadd.f32 %v169, %v237
    %v239 = vpop.f32.mrb[0].mxu0
    %v240 = vadd.f32 %v173, %v239
    %241 = vmatprep.mubr.bf16.mxu0 0
    %242 = vmatmul.mubr.bf16.gmra.mrb[0].mxu0 %v191
    %v243 = vpop.f32.mrb[0].mxu0
    %v244 = vadd.f32 %v169, %v243
    %v245 = vpop.f32.mrb[0].mxu0
    %v246 = vadd.f32 %v173, %v245
    %v247 = vpop.f32.mrb[0].mxu0
    %v248 = vadd.f32 %v169, %v247
    %v249 = vpop.f32.mrb[0].mxu0
    %v250 = vadd.f32 %v173, %v249
    %251 = vmatprep.mubr.bf16.mxu0 0
    %252 = vmatmul.mubr.bf16.gmra.mrb[0].mxu0 %v194
    %v253 = vpop.f32.mrb[0].mxu0
    %v254 = vadd.f32 %v169, %v253
    %v255 = vpop.f32.mrb[0].mxu0
    %v256 = vadd.f32 %v173, %v255
    %v257 = vpop.f32.mrb[0].mxu0
    %v258 = vadd.f32 %v169, %v257
    %v259 = vpop.f32.mrb[0].mxu0
    %v260 = vadd.f32 %v173, %v259
    %261 = vmatprep.mubr.bf16.mxu0 0
    %262 = vmatmul.mubr.bf16.gmra.mrb[0].mxu0 %v197
    %v263 = vpop.f32.mrb[0].mxu0
    %v264 = vadd.f32 %v169, %v263
    %v265 = vpop.f32.mrb[0].mxu0
    %v266 = vadd.f32 %v173, %v265
    %v267 = vpop.f32.mrb[0].mxu0
    %v268 = vadd.f32 %v169, %v267
    %v269 = vpop.f32.mrb[0].mxu0
    %v270 = vadd.f32 %v173, %v269
    %271 = vdwg.mxu0
    %272 = vmatprep.subr.bf16.mxu0 %v163
    %273 = vmatpush1.bf16.msra.mxu0 %v162
    %274 = vmatprep.subr.bf16.mxu0 0
    %275 = vmatpush1.bf16.msra.mxu0 0
    %276 = vmatprep.subr.bf16.mxu0 0
    %277 = vmatpush1.bf16.msra.mxu0 0
    %278 = vmatprep.subr.bf16.mxu0 0
    %279 = vmatpush1.bf16.msra.mxu0 0
    %280 = vmatprep.subr.bf16.mxu0 0
    %281 = vmatpush1.bf16.msra.mxu0 0
    %282 = vmatprep.subr.bf16.mxu0 0
    %283 = vmatpush1.bf16.msra.mxu0 0
    %284 = vmatprep.subr.bf16.mxu0 0
    %285 = vmatpush1.bf16.msra.mxu0 0
    %286 = vmatprep.subr.bf16.mxu0 0
    %287 = vmatpush1.bf16.msra.mxu0 0
    %288 = vmatprep.subr.bf16.mxu0 0
    %289 = vmatpush1.bf16.msra.mxu0 0
    %290 = vmatprep.subr.bf16.mxu0 0
    %291 = vmatpush1.bf16.msra.mxu0 0
    %292 = vmatprep.subr.bf16.mxu0 0
    %293 = vmatpush1.bf16.msra.mxu0 0
    %294 = vmatprep.subr.bf16.mxu0 0
    %295 = vmatpush1.bf16.msra.mxu0 0
    %296 = vmatprep.subr.bf16.mxu0 0
    %297 = vmatpush1.bf16.msra.mxu0 0
    %298 = vmatprep.subr.bf16.mxu0 0
    %299 = vmatpush1.bf16.msra.mxu0 0
    %300 = vmatprep.subr.bf16.mxu0 0
    %301 = vmatpush1.bf16.msra.mxu0 0
    %302 = vmatprep.subr.bf16.mxu0 0
    %303 = vmatpush1.bf16.msra.mxu0 0
    %304 = vmatprep.mubr.bf16.mxu0 0
    %305 = vmatmul.mubr.bf16.gmra.mrb[0].mxu0 %v188
    %v306 = vpop.f32.mrb[0].mxu0
    %v307 = vadd.f32 %v177, %v306
    %v308 = vpop.f32.mrb[0].mxu0
    %v309 = vadd.f32 %v181, %v308
    %v310 = vpop.f32.mrb[0].mxu0
    %v311 = vadd.f32 %v177, %v310
    %v312 = vpop.f32.mrb[0].mxu0
    %v313 = vadd.f32 %v181, %v312
    %314 = vmatprep.mubr.bf16.mxu0 0
    %315 = vmatmul.mubr.bf16.gmra.mrb[0].mxu0 %v191
    %v316 = vpop.f32.mrb[0].mxu0
    %v317 = vadd.f32 %v177, %v316
    %v318 = vpop.f32.mrb[0].mxu0
    %v319 = vadd.f32 %v181, %v318
    %v320 = vpop.f32.mrb[0].mxu0
    %v321 = vadd.f32 %v177, %v320
    %v322 = vpop.f32.mrb[0].mxu0
    %v323 = vadd.f32 %v181, %v322
    %324 = vmatprep.mubr.bf16.mxu0 0
    %325 = vmatmul.mubr.bf16.gmra.mrb[0].mxu0 %v194
    %v326 = vpop.f32.mrb[0].mxu0
    %v327 = vadd.f32 %v177, %v326
    %v328 = vpop.f32.mrb[0].mxu0
    %v329 = vadd.f32 %v181, %v328
    %v330 = vpop.f32.mrb[0].mxu0
    %v331 = vadd.f32 %v177, %v330
    %v332 = vpop.f32.mrb[0].mxu0
    %v333 = vadd.f32 %v181, %v332
    %334 = vmatprep.mubr.bf16.mxu0 0
    %335 = vmatmul.mubr.bf16.gmra.mrb[0].mxu0 %v197
    %v336 = vpop.f32.mrb[0].mxu0
    %v337 = vadd.f32 %v177, %v336
    %v338 = vpop.f32.mrb[0].mxu0
    %v339 = vadd.f32 %v181, %v338
    %v340 = vpop.f32.mrb[0].mxu0
    %v341 = vadd.f32 %v177, %v340
    %v342 = vpop.f32.mrb[0].mxu0
    %v343 = vadd.f32 %v181, %v342
    %344 = vdwg.mxu0
    %345 = vst [vmem:[#allocation2] sm:$0xff] %v234
    %346 = vst [vmem:[#allocation2 + $0x8] sm:$0xff] %v236
    %347 = vst [vmem:[#allocation2 + $0x10] sm:$0xff] %v307
    %348 = vst [vmem:[#allocation2 + $0x18] sm:$0xff] %v309
    %349 = vst [vmem:[#allocation2 + $0x20] sm:$0xff] %v238
    %350 = vst [vmem:[#allocation2 + $0x28] sm:$0xff] %v240
    %351 = vst [vmem:[#allocation2 + $0x30] sm:$0xff] %v311
    %352 = vst [vmem:[#allocation2 + $0x38] sm:$0xff] %v313
    %353 = vst [vmem:[#allocation2 + $0x40] sm:$0xff] %v244
    %354 = vst [vmem:[#allocation2 + $0x48] sm:$0xff] %v246
    %355 = vst [vmem:[#allocation2 + $0x50] sm:$0xff] %v317
    %356 = vst [vmem:[#allocation2 + $0x58] sm:$0xff] %v319
    %357 = vst [vmem:[#allocation2 + $0x60] sm:$0xff] %v248
    %358 = vst [vmem:[#allocation2 + $0x68] sm:$0xff] %v250
    %359 = vst [vmem:[#allocation2 + $0x70] sm:$0xff] %v321
    %360 = vst [vmem:[#allocation2 + $0x78] sm:$0xff] %v323
    %361 = vst [vmem:[#allocation2 + $0x80] sm:$0xff] %v254
    %362 = vst [vmem:[#allocation2 + $0x88] sm:$0xff] %v256
    %363 = vst [vmem:[#allocation2 + $0x90] sm:$0xff] %v327
    %364 = vst [vmem:[#allocation2 + $0x98] sm:$0xff] %v329
    %365 = vst [vmem:[#allocation2 + $0xa0] sm:$0xff] %v258
    %366 = vst [vmem:[#allocation2 + $0xa8] sm:$0xff] %v260
    %367 = vst [vmem:[#allocation2 + $0xb0] sm:$0xff] %v331
    %368 = vst [vmem:[#allocation2 + $0xb8] sm:$0xff] %v333
    %369 = vst [vmem:[#allocation2 + $0xc0] sm:$0xff] %v264
    %370 = vst [vmem:[#allocation2 + $0xc8] sm:$0xff] %v266
    %371 = vst [vmem:[#allocation2 + $0xd0] sm:$0xff] %v337
    %372 = vst [vmem:[#allocation2 + $0xd8] sm:$0xff] %v339
    %373 = vst [vmem:[#allocation2 + $0xe0] sm:$0xff] %v268
    %374 = vst [vmem:[#allocation2 + $0xe8] sm:$0xff] %v270
    %375 = vst [vmem:[#allocation2 + $0xf0] sm:$0xff] %v341
    %376 = vst [vmem:[#allocation2 + $0xf8] sm:$0xff] %v343
    %v377 = vld [vmem:[#allocation2] sm:$0xff]
    %v378 = vld [vmem:[#allocation2 + $0x8] sm:$0xff]
    %v379 = vld [vmem:[#allocation2 + $0x10] sm:$0xff]
    %v380 = vld [vmem:[#allocation2 + $0x18] sm:$0xff]
    %381 = vmatprep.subr.bf16.mxu0 %v109
    %382 = vmatpush1.bf16.msra.mxu0 %v108
    %383 = vmatprep.subr.bf16.mxu0 %v113
    %384 = vmatpush1.bf16.msra.mxu0 %v112
    %385 = vmatprep.subr.bf16.mxu0 %v117
    %386 = vmatpush1.bf16.msra.mxu0 %v116
    %387 = vmatprep.subr.bf16.mxu0 %v121
    %388 = vmatpush1.bf16.msra.mxu0 %v120
    %389 = vmatprep.subr.bf16.mxu0 %v125
    %390 = vmatpush1.bf16.msra.mxu0 %v124
    %391 = vmatprep.subr.bf16.mxu0 %v129
    %392 = vmatpush1.bf16.msra.mxu0 %v128
    %393 = vmatprep.subr.bf16.mxu0 %v133
    %394 = vmatpush1.bf16.msra.mxu0 %v132
    %395 = vmatprep.subr.bf16.mxu0 %v137
    %396 = vmatpush1.bf16.msra.mxu0 %v136
    %397 = vmatprep.subr.bf16.mxu0 0
    %398 = vmatpush1.bf16.msra.mxu0 0
    %399 = vmatprep.subr.bf16.mxu0 0
    %400 = vmatpush1.bf16.msra.mxu0 0
    %401 = vmatprep.subr.bf16.mxu0 0
    %402 = vmatpush1.bf16.msra.mxu0 0
    %403 = vmatprep.subr.bf16.mxu0 0
    %404 = vmatpush1.bf16.msra.mxu0 0
    %405 = vmatprep.subr.bf16.mxu0 0
    %406 = vmatpush1.bf16.msra.mxu0 0
    %407 = vmatprep.subr.bf16.mxu0 0
    %408 = vmatpush1.bf16.msra.mxu0 0
    %409 = vmatprep.subr.bf16.mxu0 0
    %410 = vmatpush1.bf16.msra.mxu0 0
    %411 = vmatprep.subr.bf16.mxu0 0
    %412 = vmatpush1.bf16.msra.mxu0 0
    %413 = vmatprep.mubr.bf16.mxu0 0
    %414 = vmatmul.mubr.bf16.gmra.mrb[0].mxu0 0
    %v415 = vpop.f32.mrb[0].mxu0
    %v416 = vadd.f32 0.0, %v415
    %v417 = vpop.f32.mrb[0].mxu0
    %v418 = vadd.f32 0.0, %v417
    %v419 = vpop.f32.mrb[0].mxu0
    %v420 = vpop.f32.mrb[0].mxu0
    %421 = vdwg.mxu0
    %422 = vmatprep.subr.bf16.mxu0 %v111
    %423 = vmatpush1.bf16.msra.mxu0 %v110
    %424 = vmatprep.subr.bf16.mxu0 %v115
    %425 = vmatpush1.bf16.msra.mxu0 %v114
    %426 = vmatprep.subr.bf16.mxu0 %v119
    %427 = vmatpush1.bf16.msra.mxu0 %v118
    %428 = vmatprep.subr.bf16.mxu0 %v123
    %429 = vmatpush1.bf16.msra.mxu0 %v122
    %430 = vmatprep.subr.bf16.mxu0 %v127
    %431 = vmatpush1.bf16.msra.mxu0 %v126
    %432 = vmatprep.subr.bf16.mxu0 %v131
    %433 = vmatpush1.bf16.msra.mxu0 %v130
    %434 = vmatprep.subr.bf16.mxu0 %v135
    %435 = vmatpush1.bf16.msra.mxu0 %v134
    %436 = vmatprep.subr.bf16.mxu0 %v139
    %437 = vmatpush1.bf16.msra.mxu0 %v138
    %438 = vmatprep.subr.bf16.mxu0 0
    %439 = vmatpush1.bf16.msra.mxu0 0
    %440 = vmatprep.subr.bf16.mxu0 0
    %441 = vmatpush1.bf16.msra.mxu0 0
    %442 = vmatprep.subr.bf16.mxu0 0
    %443 = vmatpush1.bf16.msra.mxu0 0
    %444 = vmatprep.subr.bf16.mxu0 0
    %445 = vmatpush1.bf16.msra.mxu0 0
    %446 = vmatprep.subr.bf16.mxu0 0
    %447 = vmatpush1.bf16.msra.mxu0 0
    %448 = vmatprep.subr.bf16.mxu0 0
    %449 = vmatpush1.bf16.msra.mxu0 0
    %450 = vmatprep.subr.bf16.mxu0 0
    %451 = vmatpush1.bf16.msra.mxu0 0
    %452 = vmatprep.subr.bf16.mxu0 0
    %453 = vmatpush1.bf16.msra.mxu0 0
    %454 = vmatprep.mubr.bf16.mxu0 0
    %455 = vmatmul.mubr.bf16.gmra.mrb[0].mxu0 0
    %v456 = vpop.f32.mrb[0].mxu0
    %v457 = vadd.f32 0.0, %v456
    %v458 = vpop.f32.mrb[0].mxu0
    %v459 = vadd.f32 0.0, %v458
    %v460 = vpop.f32.mrb[0].mxu0
    %v461 = vpop.f32.mrb[0].mxu0
    %462 = vdwg.mxu0
    %v463 = vadd.f32 %v377, %v416
    %v464 = vadd.f32 %v378, %v418
    %v465 = vadd.f32 %v379, %v457
    %v466 = vadd.f32 %v380, %v459
    %v467 = vmul.f32 %v463, 0.5
    %v468 = vtanh.pop %v467
    %v469 = vmul.f32 %v468, 0.5
    %v470 = vadd.f32 %v469, 0.5
    %v471 = vmul.f32 %v464, 0.5
    %v472 = vtanh.pop %v471
    %v473 = vmul.f32 %v472, 0.5
    %v474 = vadd.f32 %v473, 0.5
    %v475 = vtanh.pop %v465
    %v476 = vmul.f32 %v466, 0.5
    %v477 = vtanh.pop %v476
    %v478 = vmul.f32 %v477, 0.5
    %v479 = vadd.f32 %v478, 0.5
    %v480 = vmul.f32 %v474, 0.0
    %v481 = vmul.f32 %v470, %v475
    %v482 = vadd.f32 %v480, %v481
    %v483 = vtanh.pop %v482
    %v484 = vmul.f32 %v479, %v483
    %v485 = vld [vmem:[#allocation2 + $0x20] sm:$0xff]
    %v486 = vld [vmem:[#allocation2 + $0x28] sm:$0xff]
    %v487 = vld [vmem:[#allocation2 + $0x30] sm:$0xff]
    %v488 = vld [vmem:[#allocation2 + $0x38] sm:$0xff]
    %v489 = vpack.c.bf16 %v484, %v484
    %490 = vmatprep.subr.bf16.mxu0 %v109
    %491 = vmatpush1.bf16.msra.mxu0 %v108
    %492 = vmatprep.subr.bf16.mxu0 %v113
    %493 = vmatpush1.bf16.msra.mxu0 %v112
    %494 = vmatprep.subr.bf16.mxu0 %v117
    %495 = vmatpush1.bf16.msra.mxu0 %v116
    %496 = vmatprep.subr.bf16.mxu0 %v121
    %497 = vmatpush1.bf16.msra.mxu0 %v120
    %498 = vmatprep.subr.bf16.mxu0 %v125
    %499 = vmatpush1.bf16.msra.mxu0 %v124
    %500 = vmatprep.subr.bf16.mxu0 %v129
    %501 = vmatpush1.bf16.msra.mxu0 %v128
    %502 = vmatprep.subr.bf16.mxu0 %v133
    %503 = vmatpush1.bf16.msra.mxu0 %v132
    %504 = vmatprep.subr.bf16.mxu0 %v137
    %505 = vmatpush1.bf16.msra.mxu0 %v136
    %506 = vmatprep.subr.bf16.mxu0 0
    %507 = vmatpush1.bf16.msra.mxu0 0
    %508 = vmatprep.subr.bf16.mxu0 0
    %509 = vmatpush1.bf16.msra.mxu0 0
    %510 = vmatprep.subr.bf16.mxu0 0
    %511 = vmatpush1.bf16.msra.mxu0 0
    %512 = vmatprep.subr.bf16.mxu0 0
    %513 = vmatpush1.bf16.msra.mxu0 0
    %514 = vmatprep.subr.bf16.mxu0 0
    %515 = vmatpush1.bf16.msra.mxu0 0
    %516 = vmatprep.subr.bf16.mxu0 0
    %517 = vmatpush1.bf16.msra.mxu0 0
    %518 = vmatprep.subr.bf16.mxu0 0
    %519 = vmatpush1.bf16.msra.mxu0 0
    %520 = vmatprep.subr.bf16.mxu0 0
    %521 = vmatpush1.bf16.msra.mxu0 0
    %522 = vmatprep.mubr.bf16.mxu0 0
    %523 = vmatmul.mubr.bf16.gmra.mrb[0].mxu0 %v489
    %v524 = vpop.f32.mrb[0].mxu0
    %v525 = vadd.f32 0.0, %v524
    %v526 = vpop.f32.mrb[0].mxu0
    %v527 = vadd.f32 0.0, %v526
    %v528 = vpop.f32.mrb[0].mxu0
    %v529 = vpop.f32.mrb[0].mxu0
    %530 = vdwg.mxu0
    %531 = vmatprep.subr.bf16.mxu0 %v111
    %532 = vmatpush1.bf16.msra.mxu0 %v110
    %533 = vmatprep.subr.bf16.mxu0 %v115
    %534 = vmatpush1.bf16.msra.mxu0 %v114
    %535 = vmatprep.subr.bf16.mxu0 %v119
    %536 = vmatpush1.bf16.msra.mxu0 %v118
    %537 = vmatprep.subr.bf16.mxu0 %v123
    %538 = vmatpush1.bf16.msra.mxu0 %v122
    %539 = vmatprep.subr.bf16.mxu0 %v127
    %540 = vmatpush1.bf16.msra.mxu0 %v126
    %541 = vmatprep.subr.bf16.mxu0 %v131
    %542 = vmatpush1.bf16.msra.mxu0 %v130
    %543 = vmatprep.subr.bf16.mxu0 %v135
    %544 = vmatpush1.bf16.msra.mxu0 %v134
    %545 = vmatprep.subr.bf16.mxu0 %v139
    %546 = vmatpush1.bf16.msra.mxu0 %v138
    %547 = vmatprep.subr.bf16.mxu0 0
    %548 = vmatpush1.bf16.msra.mxu0 0
    %549 = vmatprep.subr.bf16.mxu0 0
    %550 = vmatpush1.bf16.msra.mxu0 0
    %551 = vmatprep.subr.bf16.mxu0 0
    %552 = vmatpush1.bf16.msra.mxu0 0
    %553 = vmatprep.subr.bf16.mxu0 0
    %554 = vmatpush1.bf16.msra.mxu0 0
    %555 = vmatprep.subr.bf16.mxu0 0
    %556 = vmatpush1.bf16.msra.mxu0 0
    %557 = vmatprep.subr.bf16.mxu0 0
    %558 = vmatpush1.bf16.msra.mxu0 0
    %559 = vmatprep.subr.bf16.mxu0 0
    %560 = vmatpush1.bf16.msra.mxu0 0
    %561 = vmatprep.subr.bf16.mxu0 0
    %562 = vmatpush1.bf16.msra.mxu0 0
    %563 = vmatprep.mubr.bf16.mxu0 0
    %564 = vmatmul.mubr.bf16.gmra.mrb[0].mxu0 %v489
    %v565 = vpop.f32.mrb[0].mxu0
    %v566 = vadd.f32 0.0, %v565
    %v567 = vpop.f32.mrb[0].mxu0
    %v568 = vadd.f32 0.0, %v567
    %v569 = vpop.f32.mrb[0].mxu0
    %v570 = vpop.f32.mrb[0].mxu0
    %571 = vdwg.mxu0
    %v572 = vadd.f32 %v485, %v525
    %v573 = vadd.f32 %v486, %v527
    %v574 = vadd.f32 %v487, %v566
    %v575 = vadd.f32 %v488, %v568
    %v576 = vmul.f32 %v572, 0.5
    %v577 = vtanh.pop %v576
    %v578 = vmul.f32 %v577, 0.5
    %v579 = vadd.f32 %v578, 0.5
    %v580 = vmul.f32 %v573, 0.5
    %v581 = vtanh.pop %v580
    %v582 = vmul.f32 %v581, 0.5
    %v583 = vadd.f32 %v582, 0.5
    %v584 = vtanh.pop %v574
    %v585 = vmul.f32 %v575, 0.5
    %v586 = vtanh.pop %v585
    %v587 = vmul.f32 %v586, 0.5
    %v588 = vadd.f32 %v587, 0.5
    %v589 = vmul.f32 %v583, %v482
    %v590 = vmul.f32 %v579, %v584
    %v591 = vadd.f32 %v589, %v590
    %v592 = vtanh.pop %v591
    %v593 = vmul.f32 %v588, %v592
    %v594 = vld [vmem:[#allocation2 + $0x40] sm:$0xff]
    %v595 = vld [vmem:[#allocation2 + $0x48] sm:$0xff]
    %v596 = vld [vmem:[#allocation2 + $0x50] sm:$0xff]
    %v597 = vld [vmem:[#allocation2 + $0x58] sm:$0xff]
    %v598 = vpack.c.bf16 %v593, %v593
    %599 = vmatprep.subr.bf16.mxu0 %v109
    %600 = vmatpush1.bf16.msra.mxu0 %v108
    %601 = vmatprep.subr.bf16.mxu0 %v113
    %602 = vmatpush1.bf16.msra.mxu0 %v112
    %603 = vmatprep.subr.bf16.mxu0 %v117
    %604 = vmatpush1.bf16.msra.mxu0 %v116
    %605 = vmatprep.subr.bf16.mxu0 %v121
    %606 = vmatpush1.bf16.msra.mxu0 %v120
    %607 = vmatprep.subr.bf16.mxu0 %v125
    %608 = vmatpush1.bf16.msra.mxu0 %v124
    %609 = vmatprep.subr.bf16.mxu0 %v129
    %610 = vmatpush1.bf16.msra.mxu0 %v128
    %611 = vmatprep.subr.bf16.mxu0 %v133
    %612 = vmatpush1.bf16.msra.mxu0 %v132
    %613 = vmatprep.subr.bf16.mxu0 %v137
    %614 = vmatpush1.bf16.msra.mxu0 %v136
    %615 = vmatprep.subr.bf16.mxu0 0
    %616 = vmatpush1.bf16.msra.mxu0 0
    %617 = vmatprep.subr.bf16.mxu0 0
    %618 = vmatpush1.bf16.msra.mxu0 0
    %619 = vmatprep.subr.bf16.mxu0 0
    %620 = vmatpush1.bf16.msra.mxu0 0
    %621 = vmatprep.subr.bf16.mxu0 0
    %622 = vmatpush1.bf16.msra.mxu0 0
    %623 = vmatprep.subr.bf16.mxu0 0
    %624 = vmatpush1.bf16.msra.mxu0 0
    %625 = vmatprep.subr.bf16.mxu0 0
    %626 = vmatpush1.bf16.msra.mxu0 0
    %627 = vmatprep.subr.bf16.mxu0 0
    %628 = vmatpush1.bf16.msra.mxu0 0
    %629 = vmatprep.subr.bf16.mxu0 0
    %630 = vmatpush1.bf16.msra.mxu0 0
    %631 = vmatprep.mubr.bf16.mxu0 0
    %632 = vmatmul.mubr.bf16.gmra.mrb[0].mxu0 %v598
    %v633 = vpop.f32.mrb[0].mxu0
    %v634 = vadd.f32 0.0, %v633
    %v635 = vpop.f32.mrb[0].mxu0
    %v636 = vadd.f32 0.0, %v635
    %v637 = vpop.f32.mrb[0].mxu0
    %v638 = vpop.f32.mrb[0].mxu0
    %639 = vdwg.mxu0
    %640 = vmatprep.subr.bf16.mxu0 %v111
    %641 = vmatpush1.bf16.msra.mxu0 %v110
    %642 = vmatprep.subr.bf16.mxu0 %v115
    %643 = vmatpush1.bf16.msra.mxu0 %v114
    %644 = vmatprep.subr.bf16.mxu0 %v119
    %645 = vmatpush1.bf16.msra.mxu0 %v118
    %646 = vmatprep.subr.bf16.mxu0 %v123
    %647 = vmatpush1.bf16.msra.mxu0 %v122
    %648 = vmatprep.subr.bf16.mxu0 %v127
    %649 = vmatpush1.bf16.msra.mxu0 %v126
    %650 = vmatprep.subr.bf16.mxu0 %v131
    %651 = vmatpush1.bf16.msra.mxu0 %v130
    %652 = vmatprep.subr.bf16.mxu0 %v135
    %653 = vmatpush1.bf16.msra.mxu0 %v134
    %654 = vmatprep.subr.bf16.mxu0 %v139
    %655 = vmatpush1.bf16.msra.mxu0 %v138
    %656 = vmatprep.subr.bf16.mxu0 0
    %657 = vmatpush1.bf16.msra.mxu0 0
    %658 = vmatprep.subr.bf16.mxu0 0
    %659 = vmatpush1.bf16.msra.mxu0 0
    %660 = vmatprep.subr.bf16.mxu0 0
    %661 = vmatpush1.bf16.msra.mxu0 0
    %662 = vmatprep.subr.bf16.mxu0 0
    %663 = vmatpush1.bf16.msra.mxu0 0
    %664 = vmatprep.subr.bf16.mxu0 0
    %665 = vmatpush1.bf16.msra.mxu0 0
    %666 = vmatprep.subr.bf16.mxu0 0
    %667 = vmatpush1.bf16.msra.mxu0 0
    %668 = vmatprep.subr.bf16.mxu0 0
    %669 = vmatpush1.bf16.msra.mxu0 0
    %670 = vmatprep.subr.bf16.mxu0 0
    %671 = vmatpush1.bf16.msra.mxu0 0
    %672 = vmatprep.mubr.bf16.mxu0 0
    %673 = vmatmul.mubr.bf16.gmra.mrb[0].mxu0 %v598
    %v674 = vpop.f32.mrb[0].mxu0
    %v675 = vadd.f32 0.0, %v674
    %v676 = vpop.f32.mrb[0].mxu0
    %v677 = vadd.f32 0.0, %v676
    %v678 = vpop.f32.mrb[0].mxu0
    %v679 = vpop.f32.mrb[0].mxu0
    %680 = vdwg.mxu0
    %v681 = vadd.f32 %v594, %v634
    %v682 = vadd.f32 %v595, %v636
    %v683 = vadd.f32 %v596, %v675
    %v684 = vadd.f32 %v597, %v677
    %v685 = vmul.f32 %v681, 0.5
    %v686 = vtanh.pop %v685
    %v687 = vmul.f32 %v686, 0.5
    %v688 = vadd.f32 %v687, 0.5
    %v689 = vmul.f32 %v682, 0.5
    %v690 = vtanh.pop %v689
    %v691 = vmul.f32 %v690, 0.5
    %v692 = vadd.f32 %v691, 0.5
    %v693 = vtanh.pop %v683
    %v694 = vmul.f32 %v684, 0.5
    %v695 = vtanh.pop %v694
    %v696 = vmul.f32 %v695, 0.5
    %v697 = vadd.f32 %v696, 0.5
    %v698 = vmul.f32 %v692, %v591
    %v699 = vmul.f32 %v688, %v693
    %v700 = vadd.f32 %v698, %v699
    %v701 = vtanh.pop %v700
    %v702 = vmul.f32 %v697, %v701
    %v703 = vld [vmem:[#allocation2 + $0x60] sm:$0xff]
    %v704 = vld [vmem:[#allocation2 + $0x68] sm:$0xff]
    %v705 = vld [vmem:[#allocation2 + $0x70] sm:$0xff]
    %v706 = vld [vmem:[#allocation2 + $0x78] sm:$0xff]
    %v707 = vpack.c.bf16 %v702, %v702
    %708 = vmatprep.subr.bf16.mxu0 %v109
    %709 = vmatpush1.bf16.msra.mxu0 %v108
    %710 = vmatprep.subr.bf16.mxu0 %v113
    %711 = vmatpush1.bf16.msra.mxu0 %v112
    %712 = vmatprep.subr.bf16.mxu0 %v117
    %713 = vmatpush1.bf16.msra.mxu0 %v116
    %714 = vmatprep.subr.bf16.mxu0 %v121
    %715 = vmatpush1.bf16.msra.mxu0 %v120
    %716 = vmatprep.subr.bf16.mxu0 %v125
    %717 = vmatpush1.bf16.msra.mxu0 %v124
    %718 = vmatprep.subr.bf16.mxu0 %v129
    %719 = vmatpush1.bf16.msra.mxu0 %v128
    %720 = vmatprep.subr.bf16.mxu0 %v133
    %721 = vmatpush1.bf16.msra.mxu0 %v132
    %722 = vmatprep.subr.bf16.mxu0 %v137
    %723 = vmatpush1.bf16.msra.mxu0 %v136
    %724 = vmatprep.subr.bf16.mxu0 0
    %725 = vmatpush1.bf16.msra.mxu0 0
    %726 = vmatprep.subr.bf16.mxu0 0
    %727 = vmatpush1.bf16.msra.mxu0 0
    %728 = vmatprep.subr.bf16.mxu0 0
    %729 = vmatpush1.bf16.msra.mxu0 0
    %730 = vmatprep.subr.bf16.mxu0 0
    %731 = vmatpush1.bf16.msra.mxu0 0
    %732 = vmatprep.subr.bf16.mxu0 0
    %733 = vmatpush1.bf16.msra.mxu0 0
    %734 = vmatprep.subr.bf16.mxu0 0
    %735 = vmatpush1.bf16.msra.mxu0 0
    %736 = vmatprep.subr.bf16.mxu0 0
    %737 = vmatpush1.bf16.msra.mxu0 0
    %738 = vmatprep.subr.bf16.mxu0 0
    %739 = vmatpush1.bf16.msra.mxu0 0
    %740 = vmatprep.mubr.bf16.mxu0 0
    %741 = vmatmul.mubr.bf16.gmra.mrb[0].mxu0 %v707
    %v742 = vpop.f32.mrb[0].mxu0
    %v743 = vadd.f32 0.0, %v742
    %v744 = vpop.f32.mrb[0].mxu0
    %v745 = vadd.f32 0.0, %v744
    %v746 = vpop.f32.mrb[0].mxu0
    %v747 = vpop.f32.mrb[0].mxu0
    %748 = vdwg.mxu0
    %749 = vmatprep.subr.bf16.mxu0 %v111
    %750 = vmatpush1.bf16.msra.mxu0 %v110
    %751 = vmatprep.subr.bf16.mxu0 %v115
    %752 = vmatpush1.bf16.msra.mxu0 %v114
    %753 = vmatprep.subr.bf16.mxu0 %v119
    %754 = vmatpush1.bf16.msra.mxu0 %v118
    %755 = vmatprep.subr.bf16.mxu0 %v123
    %756 = vmatpush1.bf16.msra.mxu0 %v122
    %757 = vmatprep.subr.bf16.mxu0 %v127
    %758 = vmatpush1.bf16.msra.mxu0 %v126
    %759 = vmatprep.subr.bf16.mxu0 %v131
    %760 = vmatpush1.bf16.msra.mxu0 %v130
    %761 = vmatprep.subr.bf16.mxu0 %v135
    %762 = vmatpush1.bf16.msra.mxu0 %v134
    %763 = vmatprep.subr.bf16.mxu0 %v139
    %764 = vmatpush1.bf16.msra.mxu0 %v138
    %765 = vmatprep.subr.bf16.mxu0 0
    %766 = vmatpush1.bf16.msra.mxu0 0
    %767 = vmatprep.subr.bf16.mxu0 0
    %768 = vmatpush1.bf16.msra.mxu0 0
    %769 = vmatprep.subr.bf16.mxu0 0
    %770 = vmatpush1.bf16.msra.mxu0 0
    %771 = vmatprep.subr.bf16.mxu0 0
    %772 = vmatpush1.bf16.msra.mxu0 0
    %773 = vmatprep.subr.bf16.mxu0 0
    %774 = vmatpush1.bf16.msra.mxu0 0
    %775 = vmatprep.subr.bf16.mxu0 0
    %776 = vmatpush1.bf16.msra.mxu0 0
    %777 = vmatprep.subr.bf16.mxu0 0
    %778 = vmatpush1.bf16.msra.mxu0 0
    %779 = vmatprep.subr.bf16.mxu0 0
    %780 = vmatpush1.bf16.msra.mxu0 0
    %781 = vmatprep.mubr.bf16.mxu0 0
    %782 = vmatmul.mubr.bf16.gmra.mrb[0].mxu0 %v707
    %v783 = vpop.f32.mrb[0].mxu0
    %v784 = vadd.f32 0.0, %v783
    %v785 = vpop.f32.mrb[0].mxu0
    %v786 = vadd.f32 0.0, %v785
    %v787 = vpop.f32.mrb[0].mxu0
    %v788 = vpop.f32.mrb[0].mxu0
    %789 = vdwg.mxu0
    %v790 = vadd.f32 %v703, %v743
    %v791 = vadd.f32 %v704, %v745
    %v792 = vadd.f32 %v705, %v784
    %v793 = vadd.f32 %v706, %v786
    %v794 = vmul.f32 %v790, 0.5
    %v795 = vtanh.pop %v794
    %v796 = vmul.f32 %v795, 0.5
    %v797 = vadd.f32 %v796, 0.5
    %v798 = vmul.f32 %v791, 0.5
    %v799 = vtanh.pop %v798
    %v800 = vmul.f32 %v799, 0.5
    %v801 = vadd.f32 %v800, 0.5
    %v802 = vtanh.pop %v792
    %v803 = vmul.f32 %v793, 0.5
    %v804 = vtanh.pop %v803
    %v805 = vmul.f32 %v804, 0.5
    %v806 = vadd.f32 %v805, 0.5
    %v807 = vmul.f32 %v801, %v700
    %v808 = vmul.f32 %v797, %v802
    %v809 = vadd.f32 %v807, %v808
    %v810 = vtanh.pop %v809
    %v811 = vmul.f32 %v806, %v810
    %v812 = vld [vmem:[#allocation2 + $0x80] sm:$0xff]
    %v813 = vld [vmem:[#allocation2 + $0x88] sm:$0xff]
    %v814 = vld [vmem:[#allocation2 + $0x90] sm:$0xff]
    %v815 = vld [vmem:[#allocation2 + $0x98] sm:$0xff]
    %v816 = vpack.c.bf16 %v811, %v811
    %817 = vmatprep.subr.bf16.mxu0 %v109
    %818 = vmatpush1.bf16.msra.mxu0 %v108
    %819 = vmatprep.subr.bf16.mxu0 %v113
    %820 = vmatpush1.bf16.msra.mxu0 %v112
    %821 = vmatprep.subr.bf16.mxu0 %v117
    %822 = vmatpush1.bf16.msra.mxu0 %v116
    %823 = vmatprep.subr.bf16.mxu0 %v121
    %824 = vmatpush1.bf16.msra.mxu0 %v120
    %825 = vmatprep.subr.bf16.mxu0 %v125
    %826 = vmatpush1.bf16.msra.mxu0 %v124
    %827 = vmatprep.subr.bf16.mxu0 %v129
    %828 = vmatpush1.bf16.msra.mxu0 %v128
    %829 = vmatprep.subr.bf16.mxu0 %v133
    %830 = vmatpush1.bf16.msra.mxu0 %v132
    %831 = vmatprep.subr.bf16.mxu0 %v137
    %832 = vmatpush1.bf16.msra.mxu0 %v136
    %833 = vmatprep.subr.bf16.mxu0 0
    %834 = vmatpush1.bf16.msra.mxu0 0
    %835 = vmatprep.subr.bf16.mxu0 0
    %836 = vmatpush1.bf16.msra.mxu0 0
    %837 = vmatprep.subr.bf16.mxu0 0
    %838 = vmatpush1.bf16.msra.mxu0 0
    %839 = vmatprep.subr.bf16.mxu0 0
    %840 = vmatpush1.bf16.msra.mxu0 0
    %841 = vmatprep.subr.bf16.mxu0 0
    %842 = vmatpush1.bf16.msra.mxu0 0
    %843 = vmatprep.subr.bf16.mxu0 0
    %844 = vmatpush1.bf16.msra.mxu0 0
    %845 = vmatprep.subr.bf16.mxu0 0
    %846 = vmatpush1.bf16.msra.mxu0 0
    %847 = vmatprep.subr.bf16.mxu0 0
    %848 = vmatpush1.bf16.msra.mxu0 0
    %849 = vmatprep.mubr.bf16.mxu0 0
    %850 = vmatmul.mubr.bf16.gmra.mrb[0].mxu0 %v816
    %v851 = vpop.f32.mrb[0].mxu0
    %v852 = vadd.f32 0.0, %v851
    %v853 = vpop.f32.mrb[0].mxu0
    %v854 = vadd.f32 0.0, %v853
    %v855 = vpop.f32.mrb[0].mxu0
    %v856 = vpop.f32.mrb[0].mxu0
    %857 = vdwg.mxu0
    %858 = vmatprep.subr.bf16.mxu0 %v111
    %859 = vmatpush1.bf16.msra.mxu0 %v110
    %860 = vmatprep.subr.bf16.mxu0 %v115
    %861 = vmatpush1.bf16.msra.mxu0 %v114
    %862 = vmatprep.subr.bf16.mxu0 %v119
    %863 = vmatpush1.bf16.msra.mxu0 %v118
    %864 = vmatprep.subr.bf16.mxu0 %v123
    %865 = vmatpush1.bf16.msra.mxu0 %v122
    %866 = vmatprep.subr.bf16.mxu0 %v127
    %867 = vmatpush1.bf16.msra.mxu0 %v126
    %868 = vmatprep.subr.bf16.mxu0 %v131
    %869 = vmatpush1.bf16.msra.mxu0 %v130
    %870 = vmatprep.subr.bf16.mxu0 %v135
    %871 = vmatpush1.bf16.msra.mxu0 %v134
    %872 = vmatprep.subr.bf16.mxu0 %v139
    %873 = vmatpush1.bf16.msra.mxu0 %v138
    %874 = vmatprep.subr.bf16.mxu0 0
    %875 = vmatpush1.bf16.msra.mxu0 0
    %876 = vmatprep.subr.bf16.mxu0 0
    %877 = vmatpush1.bf16.msra.mxu0 0
    %878 = vmatprep.subr.bf16.mxu0 0
    %879 = vmatpush1.bf16.msra.mxu0 0
    %880 = vmatprep.subr.bf16.mxu0 0
    %881 = vmatpush1.bf16.msra.mxu0 0
    %882 = vmatprep.subr.bf16.mxu0 0
    %883 = vmatpush1.bf16.msra.mxu0 0
    %884 = vmatprep.subr.bf16.mxu0 0
    %885 = vmatpush1.bf16.msra.mxu0 0
    %886 = vmatprep.subr.bf16.mxu0 0
    %887 = vmatpush1.bf16.msra.mxu0 0
    %888 = vmatprep.subr.bf16.mxu0 0
    %889 = vmatpush1.bf16.msra.mxu0 0
    %890 = vmatprep.mubr.bf16.mxu0 0
    %891 = vmatmul.mubr.bf16.gmra.mrb[0].mxu0 %v816
    %v892 = vpop.f32.mrb[0].mxu0
    %v893 = vadd.f32 0.0, %v892
    %v894 = vpop.f32.mrb[0].mxu0
    %v895 = vadd.f32 0.0, %v894
    %v896 = vpop.f32.mrb[0].mxu0
    %v897 = vpop.f32.mrb[0].mxu0
    %898 = vdwg.mxu0
    %v899 = vadd.f32 %v812, %v852
    %v900 = vadd.f32 %v813, %v854
    %v901 = vadd.f32 %v814, %v893
    %v902 = vadd.f32 %v815, %v895
    %v903 = vmul.f32 %v899, 0.5
    %v904 = vtanh.pop %v903
    %v905 = vmul.f32 %v904, 0.5
    %v906 = vadd.f32 %v905, 0.5
    %v907 = vmul.f32 %v900, 0.5
    %v908 = vtanh.pop %v907
    %v909 = vmul.f32 %v908, 0.5
    %v910 = vadd.f32 %v909, 0.5
    %v911 = vtanh.pop %v901
    %v912 = vmul.f32 %v902, 0.5
    %v913 = vtanh.pop %v912
    %v914 = vmul.f32 %v913, 0.5
    %v915 = vadd.f32 %v914, 0.5
    %v916 = vmul.f32 %v910, %v809
    %v917 = vmul.f32 %v906, %v911
    %v918 = vadd.f32 %v916, %v917
    %v919 = vtanh.pop %v918
    %v920 = vmul.f32 %v915, %v919
    %v921 = vld [vmem:[#allocation2 + $0xa0] sm:$0xff]
    %v922 = vld [vmem:[#allocation2 + $0xa8] sm:$0xff]
    %v923 = vld [vmem:[#allocation2 + $0xb0] sm:$0xff]
    %v924 = vld [vmem:[#allocation2 + $0xb8] sm:$0xff]
    %v925 = vpack.c.bf16 %v920, %v920
    %926 = vmatprep.subr.bf16.mxu0 %v109
    %927 = vmatpush1.bf16.msra.mxu0 %v108
    %928 = vmatprep.subr.bf16.mxu0 %v113
    %929 = vmatpush1.bf16.msra.mxu0 %v112
    %930 = vmatprep.subr.bf16.mxu0 %v117
    %931 = vmatpush1.bf16.msra.mxu0 %v116
    %932 = vmatprep.subr.bf16.mxu0 %v121
    %933 = vmatpush1.bf16.msra.mxu0 %v120
    %934 = vmatprep.subr.bf16.mxu0 %v125
    %935 = vmatpush1.bf16.msra.mxu0 %v124
    %936 = vmatprep.subr.bf16.mxu0 %v129
    %937 = vmatpush1.bf16.msra.mxu0 %v128
    %938 = vmatprep.subr.bf16.mxu0 %v133
    %939 = vmatpush1.bf16.msra.mxu0 %v132
    %940 = vmatprep.subr.bf16.mxu0 %v137
    %941 = vmatpush1.bf16.msra.mxu0 %v136
    %942 = vmatprep.subr.bf16.mxu0 0
    %943 = vmatpush1.bf16.msra.mxu0 0
    %944 = vmatprep.subr.bf16.mxu0 0
    %945 = vmatpush1.bf16.msra.mxu0 0
    %946 = vmatprep.subr.bf16.mxu0 0
    %947 = vmatpush1.bf16.msra.mxu0 0
    %948 = vmatprep.subr.bf16.mxu0 0
    %949 = vmatpush1.bf16.msra.mxu0 0
    %950 = vmatprep.subr.bf16.mxu0 0
    %951 = vmatpush1.bf16.msra.mxu0 0
    %952 = vmatprep.subr.bf16.mxu0 0
    %953 = vmatpush1.bf16.msra.mxu0 0
    %954 = vmatprep.subr.bf16.mxu0 0
    %955 = vmatpush1.bf16.msra.mxu0 0
    %956 = vmatprep.subr.bf16.mxu0 0
    %957 = vmatpush1.bf16.msra.mxu0 0
    %958 = vmatprep.mubr.bf16.mxu0 0
    %959 = vmatmul.mubr.bf16.gmra.mrb[0].mxu0 %v925
    %v960 = vpop.f32.mrb[0].mxu0
    %v961 = vadd.f32 0.0, %v960
    %v962 = vpop.f32.mrb[0].mxu0
    %v963 = vadd.f32 0.0, %v962
    %v964 = vpop.f32.mrb[0].mxu0
    %v965 = vpop.f32.mrb[0].mxu0
    %966 = vdwg.mxu0
    %967 = vmatprep.subr.bf16.mxu0 %v111
    %968 = vmatpush1.bf16.msra.mxu0 %v110
    %969 = vmatprep.subr.bf16.mxu0 %v115
    %970 = vmatpush1.bf16.msra.mxu0 %v114
    %971 = vmatprep.subr.bf16.mxu0 %v119
    %972 = vmatpush1.bf16.msra.mxu0 %v118
    %973 = vmatprep.subr.bf16.mxu0 %v123
    %974 = vmatpush1.bf16.msra.mxu0 %v122
    %975 = vmatprep.subr.bf16.mxu0 %v127
    %976 = vmatpush1.bf16.msra.mxu0 %v126
    %977 = vmatprep.subr.bf16.mxu0 %v131
    %978 = vmatpush1.bf16.msra.mxu0 %v130
    %979 = vmatprep.subr.bf16.mxu0 %v135
    %980 = vmatpush1.bf16.msra.mxu0 %v134
    %981 = vmatprep.subr.bf16.mxu0 %v139
    %982 = vmatpush1.bf16.msra.mxu0 %v138
    %983 = vmatprep.subr.bf16.mxu0 0
    %984 = vmatpush1.bf16.msra.mxu0 0
    %985 = vmatprep.subr.bf16.mxu0 0
    %986 = vmatpush1.bf16.msra.mxu0 0
    %987 = vmatprep.subr.bf16.mxu0 0
    %988 = vmatpush1.bf16.msra.mxu0 0
    %989 = vmatprep.subr.bf16.mxu0 0
    %990 = vmatpush1.bf16.msra.mxu0 0
    %991 = vmatprep.subr.bf16.mxu0 0
    %992 = vmatpush1.bf16.msra.mxu0 0
    %993 = vmatprep.subr.bf16.mxu0 0
    %994 = vmatpush1.bf16.msra.mxu0 0
    %995 = vmatprep.subr.bf16.mxu0 0
    %996 = vmatpush1.bf16.msra.mxu0 0
    %997 = vmatprep.subr.bf16.mxu0 0
    %998 = vmatpush1.bf16.msra.mxu0 0
    %999 = vmatprep.mubr.bf16.mxu0 0
    %1000 = vmatmul.mubr.bf16.gmra.mrb[0].mxu0 %v925
    %v1001 = vpop.f32.mrb[0].mxu0
    %v1002 = vadd.f32 0.0, %v1001
    %v1003 = vpop.f32.mrb[0].mxu0
    %v1004 = vadd.f32 0.0, %v1003
    %v1005 = vpop.f32.mrb[0].mxu0
    %v1006 = vpop.f32.mrb[0].mxu0
    %1007 = vdwg.mxu0
    %v1008 = vadd.f32 %v921, %v961
    %v1009 = vadd.f32 %v922, %v963
    %v1010 = vadd.f32 %v923, %v1002
    %v1011 = vadd.f32 %v924, %v1004
    %v1012 = vmul.f32 %v1008, 0.5
    %v1013 = vtanh.pop %v1012
    %v1014 = vmul.f32 %v1013, 0.5
    %v1015 = vadd.f32 %v1014, 0.5
    %v1016 = vmul.f32 %v1009, 0.5
    %v1017 = vtanh.pop %v1016
    %v1018 = vmul.f32 %v1017, 0.5
    %v1019 = vadd.f32 %v1018, 0.5
    %v1020 = vtanh.pop %v1010
    %v1021 = vmul.f32 %v1011, 0.5
    %v1022 = vtanh.pop %v1021
    %v1023 = vmul.f32 %v1022, 0.5
    %v1024 = vadd.f32 %v1023, 0.5
    %v1025 = vmul.f32 %v1019, %v918
    %v1026 = vmul.f32 %v1015, %v1020
    %v1027 = vadd.f32 %v1025, %v1026
    %v1028 = vtanh.pop %v1027
    %v1029 = vmul.f32 %v1024, %v1028
    %v1030 = vld [vmem:[#allocation2 + $0xc0] sm:$0xff]
    %v1031 = vld [vmem:[#allocation2 + $0xc8] sm:$0xff]
    %v1032 = vld [vmem:[#allocation2 + $0xd0] sm:$0xff]
    %v1033 = vld [vmem:[#allocation2 + $0xd8] sm:$0xff]
    %v1034 = vpack.c.bf16 %v1029, %v1029
    %1035 = vmatprep.subr.bf16.mxu0 %v109
    %1036 = vmatpush1.bf16.msra.mxu0 %v108
    %1037 = vmatprep.subr.bf16.mxu0 %v113
    %1038 = vmatpush1.bf16.msra.mxu0 %v112
    %1039 = vmatprep.subr.bf16.mxu0 %v117
    %1040 = vmatpush1.bf16.msra.mxu0 %v116
    %1041 = vmatprep.subr.bf16.mxu0 %v121
    %1042 = vmatpush1.bf16.msra.mxu0 %v120
    %1043 = vmatprep.subr.bf16.mxu0 %v125
    %1044 = vmatpush1.bf16.msra.mxu0 %v124
    %1045 = vmatprep.subr.bf16.mxu0 %v129
    %1046 = vmatpush1.bf16.msra.mxu0 %v128
    %1047 = vmatprep.subr.bf16.mxu0 %v133
    %1048 = vmatpush1.bf16.msra.mxu0 %v132
    %1049 = vmatprep.subr.bf16.mxu0 %v137
    %1050 = vmatpush1.bf16.msra.mxu0 %v136
    %1051 = vmatprep.subr.bf16.mxu0 0
    %1052 = vmatpush1.bf16.msra.mxu0 0
    %1053 = vmatprep.subr.bf16.mxu0 0
    %1054 = vmatpush1.bf16.msra.mxu0 0
    %1055 = vmatprep.subr.bf16.mxu0 0
    %1056 = vmatpush1.bf16.msra.mxu0 0
    %1057 = vmatprep.subr.bf16.mxu0 0
    %1058 = vmatpush1.bf16.msra.mxu0 0
    %1059 = vmatprep.subr.bf16.mxu0 0
    %1060 = vmatpush1.bf16.msra.mxu0 0
    %1061 = vmatprep.subr.bf16.mxu0 0
    %1062 = vmatpush1.bf16.msra.mxu0 0
    %1063 = vmatprep.subr.bf16.mxu0 0
    %1064 = vmatpush1.bf16.msra.mxu0 0
    %1065 = vmatprep.subr.bf16.mxu0 0
    %1066 = vmatpush1.bf16.msra.mxu0 0
    %1067 = vmatprep.mubr.bf16.mxu0 0
    %1068 = vmatmul.mubr.bf16.gmra.mrb[0].mxu0 %v1034
    %v1069 = vpop.f32.mrb[0].mxu0
    %v1070 = vadd.f32 0.0, %v1069
    %v1071 = vpop.f32.mrb[0].mxu0
    %v1072 = vadd.f32 0.0, %v1071
    %v1073 = vpop.f32.mrb[0].mxu0
    %v1074 = vpop.f32.mrb[0].mxu0
    %1075 = vdwg.mxu0
    %1076 = vmatprep.subr.bf16.mxu0 %v111
    %1077 = vmatpush1.bf16.msra.mxu0 %v110
    %1078 = vmatprep.subr.bf16.mxu0 %v115
    %1079 = vmatpush1.bf16.msra.mxu0 %v114
    %1080 = vmatprep.subr.bf16.mxu0 %v119
    %1081 = vmatpush1.bf16.msra.mxu0 %v118
    %1082 = vmatprep.subr.bf16.mxu0 %v123
    %1083 = vmatpush1.bf16.msra.mxu0 %v122
    %1084 = vmatprep.subr.bf16.mxu0 %v127
    %1085 = vmatpush1.bf16.msra.mxu0 %v126
    %1086 = vmatprep.subr.bf16.mxu0 %v131
    %1087 = vmatpush1.bf16.msra.mxu0 %v130
    %1088 = vmatprep.subr.bf16.mxu0 %v135
    %1089 = vmatpush1.bf16.msra.mxu0 %v134
    %1090 = vmatprep.subr.bf16.mxu0 %v139
    %1091 = vmatpush1.bf16.msra.mxu0 %v138
    %1092 = vmatprep.subr.bf16.mxu0 0
    %1093 = vmatpush1.bf16.msra.mxu0 0
    %1094 = vmatprep.subr.bf16.mxu0 0
    %1095 = vmatpush1.bf16.msra.mxu0 0
    %1096 = vmatprep.subr.bf16.mxu0 0
    %1097 = vmatpush1.bf16.msra.mxu0 0
    %1098 = vmatprep.subr.bf16.mxu0 0
    %1099 = vmatpush1.bf16.msra.mxu0 0
    %1100 = vmatprep.subr.bf16.mxu0 0
    %1101 = vmatpush1.bf16.msra.mxu0 0
    %1102 = vmatprep.subr.bf16.mxu0 0
    %1103 = vmatpush1.bf16.msra.mxu0 0
    %1104 = vmatprep.subr.bf16.mxu0 0
    %1105 = vmatpush1.bf16.msra.mxu0 0
    %1106 = vmatprep.subr.bf16.mxu0 0
    %1107 = vmatpush1.bf16.msra.mxu0 0
    %1108 = vmatprep.mubr.bf16.mxu0 0
    %1109 = vmatmul.mubr.bf16.gmra.mrb[0].mxu0 %v1034
    %v1110 = vpop.f32.mrb[0].mxu0
    %v1111 = vadd.f32 0.0, %v1110
    %v1112 = vpop.f32.mrb[0].mxu0
    %v1113 = vadd.f32 0.0, %v1112
    %v1114 = vpop.f32.mrb[0].mxu0
    %v1115 = vpop.f32.mrb[0].mxu0
    %1116 = vdwg.mxu0
    %v1117 = vadd.f32 %v1030, %v1070
    %v1118 = vadd.f32 %v1031, %v1072
    %v1119 = vadd.f32 %v1032, %v1111
    %v1120 = vadd.f32 %v1033, %v1113
    %v1121 = vmul.f32 %v1117, 0.5
    %v1122 = vtanh.pop %v1121
    %v1123 = vmul.f32 %v1122, 0.5
    %v1124 = vadd.f32 %v1123, 0.5
    %v1125 = vmul.f32 %v1118, 0.5
    %v1126 = vtanh.pop %v1125
    %v1127 = vmul.f32 %v1126, 0.5
    %v1128 = vadd.f32 %v1127, 0.5
    %v1129 = vtanh.pop %v1119
    %v1130 = vmul.f32 %v1120, 0.5
    %v1131 = vtanh.pop %v1130
    %v1132 = vmul.f32 %v1131, 0.5
    %v1133 = vadd.f32 %v1132, 0.5
    %v1134 = vmul.f32 %v1128, %v1027
    %v1135 = vmul.f32 %v1124, %v1129
    %v1136 = vadd.f32 %v1134, %v1135
    %v1137 = vtanh.pop %v1136
    %v1138 = vmul.f32 %v1133, %v1137
    %v1139 = vld [vmem:[#allocation2 + $0xe0] sm:$0xff]
    %v1140 = vld [vmem:[#allocation2 + $0xe8] sm:$0xff]
    %v1141 = vld [vmem:[#allocation2 + $0xf0] sm:$0xff]
    %v1142 = vld [vmem:[#allocation2 + $0xf8] sm:$0xff]
    %v1143 = vpack.c.bf16 %v1138, %v1138
    %1144 = vmatprep.subr.bf16.mxu0 %v109
    %1145 = vmatpush1.bf16.msra.mxu0 %v108
    %1146 = vmatprep.subr.bf16.mxu0 %v113
    %1147 = vmatpush1.bf16.msra.mxu0 %v112
    %1148 = vmatprep.subr.bf16.mxu0 %v117
    %1149 = vmatpush1.bf16.msra.mxu0 %v116
    %1150 = vmatprep.subr.bf16.mxu0 %v121
    %1151 = vmatpush1.bf16.msra.mxu0 %v120
    %1152 = vmatprep.subr.bf16.mxu0 %v125
    %1153 = vmatpush1.bf16.msra.mxu0 %v124
    %1154 = vmatprep.subr.bf16.mxu0 %v129
    %1155 = vmatpush1.bf16.msra.mxu0 %v128
    %1156 = vmatprep.subr.bf16.mxu0 %v133
    %1157 = vmatpush1.bf16.msra.mxu0 %v132
    %1158 = vmatprep.subr.bf16.mxu0 %v137
    %1159 = vmatpush1.bf16.msra.mxu0 %v136
    %1160 = vmatprep.subr.bf16.mxu0 0
    %1161 = vmatpush1.bf16.msra.mxu0 0
    %1162 = vmatprep.subr.bf16.mxu0 0
    %1163 = vmatpush1.bf16.msra.mxu0 0
    %1164 = vmatprep.subr.bf16.mxu0 0
    %1165 = vmatpush1.bf16.msra.mxu0 0
    %1166 = vmatprep.subr.bf16.mxu0 0
    %1167 = vmatpush1.bf16.msra.mxu0 0
    %1168 = vmatprep.subr.bf16.mxu0 0
    %1169 = vmatpush1.bf16.msra.mxu0 0
    %1170 = vmatprep.subr.bf16.mxu0 0
    %1171 = vmatpush1.bf16.msra.mxu0 0
    %1172 = vmatprep.subr.bf16.mxu0 0
    %1173 = vmatpush1.bf16.msra.mxu0 0
    %1174 = vmatprep.subr.bf16.mxu0 0
    %1175 = vmatpush1.bf16.msra.mxu0 0
    %1176 = vmatprep.mubr.bf16.mxu0 0
    %1177 = vmatmul.mubr.bf16.gmra.mrb[0].mxu0 %v1143
    %v1178 = vpop.f32.mrb[0].mxu0
    %v1179 = vadd.f32 0.0, %v1178
    %v1180 = vpop.f32.mrb[0].mxu0
    %v1181 = vadd.f32 0.0, %v1180
    %v1182 = vpop.f32.mrb[0].mxu0
    %v1183 = vpop.f32.mrb[0].mxu0
    %1184 = vdwg.mxu0
    %1185 = vmatprep.subr.bf16.mxu0 %v111
    %1186 = vmatpush1.bf16.msra.mxu0 %v110
    %1187 = vmatprep.subr.bf16.mxu0 %v115
    %1188 = vmatpush1.bf16.msra.mxu0 %v114
    %1189 = vmatprep.subr.bf16.mxu0 %v119
    %1190 = vmatpush1.bf16.msra.mxu0 %v118
    %1191 = vmatprep.subr.bf16.mxu0 %v123
    %1192 = vmatpush1.bf16.msra.mxu0 %v122
    %1193 = vmatprep.subr.bf16.mxu0 %v127
    %1194 = vmatpush1.bf16.msra.mxu0 %v126
    %1195 = vmatprep.subr.bf16.mxu0 %v131
    %1196 = vmatpush1.bf16.msra.mxu0 %v130
    %1197 = vmatprep.subr.bf16.mxu0 %v135
    %1198 = vmatpush1.bf16.msra.mxu0 %v134
    %1199 = vmatprep.subr.bf16.mxu0 %v139
    %1200 = vmatpush1.bf16.msra.mxu0 %v138
    %1201 = vmatprep.subr.bf16.mxu0 0
    %1202 = vmatpush1.bf16.msra.mxu0 0
    %1203 = vmatprep.subr.bf16.mxu0 0
    %1204 = vmatpush1.bf16.msra.mxu0 0
    %1205 = vmatprep.subr.bf16.mxu0 0
    %1206 = vmatpush1.bf16.msra.mxu0 0
    %1207 = vmatprep.subr.bf16.mxu0 0
    %1208 = vmatpush1.bf16.msra.mxu0 0
    %1209 = vmatprep.subr.bf16.mxu0 0
    %1210 = vmatpush1.bf16.msra.mxu0 0
    %1211 = vmatprep.subr.bf16.mxu0 0
    %1212 = vmatpush1.bf16.msra.mxu0 0
    %1213 = vmatprep.subr.bf16.mxu0 0
    %1214 = vmatpush1.bf16.msra.mxu0 0
    %1215 = vmatprep.subr.bf16.mxu0 0
    %1216 = vmatpush1.bf16.msra.mxu0 0
    %1217 = vmatprep.mubr.bf16.mxu0 0
    %1218 = vmatmul.mubr.bf16.gmra.mrb[0].mxu0 %v1143
    %v1219 = vpop.f32.mrb[0].mxu0
    %v1220 = vadd.f32 0.0, %v1219
    %v1221 = vpop.f32.mrb[0].mxu0
    %v1222 = vadd.f32 0.0, %v1221
    %v1223 = vpop.f32.mrb[0].mxu0
    %v1224 = vpop.f32.mrb[0].mxu0
    %1225 = vdwg.mxu0
    %v1226 = vadd.f32 %v1139, %v1179
    %v1227 = vadd.f32 %v1140, %v1181
    %v1228 = vadd.f32 %v1141, %v1220
    %v1229 = vadd.f32 %v1142, %v1222
    %v1230 = vmul.f32 %v1226, 0.5
    %v1231 = vtanh.pop %v1230
    %v1232 = vmul.f32 %v1231, 0.5
    %v1233 = vadd.f32 %v1232, 0.5
    %v1234 = vmul.f32 %v1227, 0.5
    %v1235 = vtanh.pop %v1234
    %v1236 = vmul.f32 %v1235, 0.5
    %v1237 = vadd.f32 %v1236, 0.5
    %v1238 = vtanh.pop %v1228
    %v1239 = vmul.f32 %v1229, 0.5
    %v1240 = vtanh.pop %v1239
    %v1241 = vmul.f32 %v1240, 0.5
    %v1242 = vadd.f32 %v1241, 0.5
    %v1243 = vmul.f32 %v1237, %v1136
    %v1244 = vmul.f32 %v1233, %v1238
    %v1245 = vadd.f32 %v1243, %v1244
    %v1246 = vtanh.pop %v1245
    %v1247 = vmul.f32 %v1242, %v1246
    %v1248 = vlaneseq
    %v1249 = vshrl.u32 %v1248, 7
    %vm1250 = vcmp.lt.s32.totalorder %v1249, 2
    %v1251 = vsel %vm1250, 1, 0
    %vm1252 = vcmp.eq.s32.totalorder %v1251, 1
    %v1253 = vsel %vm1252, %v1247, 0.0
    %v1254 = vrot.slane %v1253, 4
    %v1255 = vadd.f32 %v1253, %v1254
    %v1256 = vrot.slane %v1255, 2
    %v1257 = vadd.f32 %v1255, %v1256
    %v1258 = vrot.slane %v1257, 1
    %v1259 = vadd.f32 %v1257, %v1258
    %v1260 = vmul.f32 %v1259, 0.5
    %v1261 = vsub.f32 %v1247, %v1260
    %v1262 = vsel %vm1252, %v1261, 0.0
    %v1263 = vmul.f32 %v1262, %v1262
    %v1264 = vrot.slane %v1263, 4
    %v1265 = vadd.f32 %v1263, %v1264
    %v1266 = vrot.slane %v1265, 2
    %v1267 = vadd.f32 %v1265, %v1266
    %v1268 = vrot.slane %v1267, 1
    %v1269 = vadd.f32 %v1267, %v1268
    %v1270 = vmul.f32 %v1269, 0.5
    %v1271 = vadd.f32 %v1270, 1e-05
    %v1272 = vrsqrt.pop %v1271
    %v1273 = vmul.f32 %v1261, %v1272
    %v1274 = vld [vmem:[%s4] sm:$0x1]
    %v1276 = vlaneseq
    %v1277 = vshrl.u32 %v1276, 7
    %v1278 = vsub.s32 0, %v1277
    %v1279 = vrot.slane %v1274, %v1278
    %v1281 = vmul.f32 %v1273, %v1279
    %v1282 = vld [vmem:[%s5] sm:$0x1]
    %v1284 = vlaneseq
    %v1285 = vshrl.u32 %v1284, 7
    %v1286 = vsub.s32 0, %v1285
    %v1287 = vrot.slane %v1282, %v1286
    %v1289 = vadd.f32 %v1281, %v1287
    %v1290 = vmax.f32 %v1289, 0.0
    %v1291 = vpack.c.bf16 %v1290, %v1290
    %v1292 = vld [vmem:[%s6] sm:$0xff]
    %v1293 = vld [vmem:[%s6 + $0x8] sm:$0xff]
    %v1294 = vld [vmem:[%s6 + $0x10] sm:$0xff]
    %v1295 = vld [vmem:[%s6 + $0x18] sm:$0xff]
    %v1296 = vld [vmem:[%s6 + $0x20] sm:$0xff]
    %v1297 = vld [vmem:[%s6 + $0x28] sm:$0xff]
    %v1298 = vld [vmem:[%s6 + $0x30] sm:$0xff]
    %v1299 = vld [vmem:[%s6 + $0x38] sm:$0xff]
    %v1300 = vld [vmem:[%s6 + $0x40] sm:$0xff]
    %v1301 = vld [vmem:[%s6 + $0x48] sm:$0xff]
    %v1302 = vld [vmem:[%s6 + $0x50] sm:$0xff]
    %v1303 = vld [vmem:[%s6 + $0x58] sm:$0xff]
    %v1304 = vld [vmem:[%s6 + $0x60] sm:$0xff]
    %v1305 = vld [vmem:[%s6 + $0x68] sm:$0xff]
    %v1306 = vld [vmem:[%s6 + $0x70] sm:$0xff]
    %v1307 = vld [vmem:[%s6 + $0x78] sm:$0xff]
    %v1308 = vpack.c.bf16 %v1293, %v1292
    %v1309 = vpack.c.bf16 %v1295, %v1294
    %v1310 = vpack.c.bf16 %v1297, %v1296
    %v1311 = vpack.c.bf16 %v1299, %v1298
    %v1312 = vpack.c.bf16 %v1301, %v1300
    %v1313 = vpack.c.bf16 %v1303, %v1302
    %v1314 = vpack.c.bf16 %v1305, %v1304
    %v1315 = vpack.c.bf16 %v1307, %v1306
    %v1316 = vld [vmem:[%s7] sm:$0x1]
    %v1318 = vlaneseq
    %v1319 = vshrl.u32 %v1318, 7
    %v1320 = vsub.s32 0, %v1319
    %v1321 = vrot.slane %v1316, %v1320
    %1323 = vmatprep.subr.bf16.mxu0 0
    %1324 = vmatpush1.bf16.msra.mxu0 %v1308
    %1325 = vmatprep.subr.bf16.mxu0 0
    %1326 = vmatpush1.bf16.msra.mxu0 %v1309
    %1327 = vmatprep.subr.bf16.mxu0 0
    %1328 = vmatpush1.bf16.msra.mxu0 %v1310
    %1329 = vmatprep.subr.bf16.mxu0 0
    %1330 = vmatpush1.bf16.msra.mxu0 %v1311
    %1331 = vmatprep.subr.bf16.mxu0 0
    %1332 = vmatpush1.bf16.msra.mxu0 %v1312
    %1333 = vmatprep.subr.bf16.mxu0 0
    %1334 = vmatpush1.bf16.msra.mxu0 %v1313
    %1335 = vmatprep.subr.bf16.mxu0 0
    %1336 = vmatpush1.bf16.msra.mxu0 %v1314
    %1337 = vmatprep.subr.bf16.mxu0 0
    %1338 = vmatpush1.bf16.msra.mxu0 %v1315
    %1339 = vmatprep.subr.bf16.mxu0 0
    %1340 = vmatpush1.bf16.msra.mxu0 0
    %1341 = vmatprep.subr.bf16.mxu0 0
    %1342 = vmatpush1.bf16.msra.mxu0 0
    %1343 = vmatprep.subr.bf16.mxu0 0
    %1344 = vmatpush1.bf16.msra.mxu0 0
    %1345 = vmatprep.subr.bf16.mxu0 0
    %1346 = vmatpush1.bf16.msra.mxu0 0
    %1347 = vmatprep.subr.bf16.mxu0 0
    %1348 = vmatpush1.bf16.msra.mxu0 0
    %1349 = vmatprep.subr.bf16.mxu0 0
    %1350 = vmatpush1.bf16.msra.mxu0 0
    %1351 = vmatprep.subr.bf16.mxu0 0
    %1352 = vmatpush1.bf16.msra.mxu0 0
    %1353 = vmatprep.subr.bf16.mxu0 0
    %1354 = vmatpush1.bf16.msra.mxu0 0
    %1355 = vmatprep.mubr.bf16.mxu0 0
    %1356 = vmatmul.mubr.bf16.gmra.mrb[0].mxu0 %v1291
    %v1357 = vpop.f32.mrb[0].mxu0
    %v1358 = vadd.f32 %v1321, %v1357
    %v1359 = vpop.f32.mrb[0].mxu0
    %v1360 = vpop.f32.mrb[0].mxu0
    %v1361 = vpop.f32.mrb[0].mxu0
    %1362 = vdwg.mxu0
    %1363 = vst [vmem:[%s8] sm:$0xff] %v1358
    // Predicated region
    $region38: #{lstm_nn_forward.1} parent=1 // pred_check
      _
    $region39: #{lstm_nn_forward.1} parent=1 // pred_check_branch
      %1365 = sbr.rel (0) target = $region41
    $region40: #{lstm_nn_forward.1} parent=1 // pred_region
      _
    $region41: #{lstm_nn_forward.1} parent=1 // pred_fallthru
      _
    // Predicated region
    $region42: #{lstm_nn_forward.1} parent=1 // pred_check
      _
    $region43: #{lstm_nn_forward.1} parent=1 // pred_check_branch
      %1367 = sbr.rel (0) target = $region45
    $region44: #{lstm_nn_forward.1} parent=1 // pred_region
      _
    $region45: #{lstm_nn_forward.1} parent=1 // pred_fallthru
      _
    %1368 = vsyncpa [#allocation4], 1

</llo_original>
